<compile_context>
chip_gen: v6e
topology: v6e:2x2x1
jax: 0.10.0
libtpu: 0.0.40
codegen_flags: <defaults>
</compile_context>

<pallas_src>
import math

import jax
import jax.numpy as jnp
from jax.experimental import pallas as pl
from jax.experimental.pallas import tpu as pltpu

# ---------------- model hyper-parameters (small, consistent with module) ----
BATCH      = 2
SEQ_LEN    = 8
INPUT_SIZE = 4
D_MODEL    = 32
NHEAD      = 4
NUM_LAYERS = 2
DIM_FF     = 64
PRED_LEN   = 4
LN_EPS     = 1e-5

HEAD_DIM = D_MODEL // NHEAD          # 8
ROWS     = BATCH * SEQ_LEN           # 16 (batch folded into rows)
OUT_ROWS = BATCH * PRED_LEN          # 8
LANES    = 128                       # single lane-dense weight slab
NEG_INF  = -1e30                     # additive mask value (safe: exp underflows to 0)

# ---------------- single packed slab (bf16, 128 lanes) row layout -----------
# All row offsets are multiples of 8; matmul weight blocks start at lane 0.
G_WIN  = 0            # rows 0..3   : w_in^T (INPUT_SIZE, d)          lanes 0:d
G_PE   = 8            # rows 8..23  : PE tiled (ROWS, d)              lanes 0:d
                      #               additive mask (ROWS, ROWS)      lanes d:d+ROWS
G_VEC  = 24           # row 24: b_in (1, d) ; row 25: b_out (1, F)
LAYER_BASE = 32
L_WQKV = 0            # 32 rows : [Wq^T*scale | Wk^T | Wv^T]  (d, 3d)  lanes 0:3d
L_WO   = 32           # 32 rows : Wo^T (d, d)   (rows h*hd.. = Wo_h^T) lanes 0:d
L_W1   = 64           # 32 rows : W1^T (d, dff)                        lanes 0:dff
L_W2   = 96           # 64 rows : W2^T (dff, d)                        lanes 0:d
L_VEC  = 160          # 8 rows  : bqkv | bo | g1 | bt1 | b1 | b2 | g2 | bt2
LAYER_ROWS = 168
W_OUT_OFF  = LAYER_BASE + NUM_LAYERS * LAYER_ROWS   # 368 : w_out^T (d, F) lanes 0:F
TOTAL_ROWS = W_OUT_OFF + D_MODEL                    # 400


def _layer_norm(x, gamma, beta):
    # PyTorch LayerNorm: biased variance over last dim, eps=1e-5, affine (f32 math)
    mu = jnp.mean(x, axis=-1, keepdims=True)
    var = jnp.mean((x - mu) ** 2, axis=-1, keepdims=True)
    return (x - mu) * jax.lax.rsqrt(var + LN_EPS) * gamma + beta


def transformer_kernel(src_ref, w_ref, out_ref):
    f32, bf16 = jnp.float32, jnp.bfloat16
    d, hd, dff, F = D_MODEL, HEAD_DIM, DIM_FF, INPUT_SIZE

    def vec(row, width):
        # single parameter row, promoted to f32 for elementwise math
        return w_ref[row:row + 1, :width].astype(f32)

    # ---- input projection + positional encoding (PE pre-tiled to ROWS) -----
    w_in = w_ref[G_WIN:G_WIN + F, :d]                               # (F, d) bf16
    x = jnp.dot(src_ref[...].astype(bf16), w_in, preferred_element_type=f32)
    x = x + vec(G_VEC + 0, d)                                       # + b_in
    x = x + w_ref[G_PE:G_PE + ROWS, :d].astype(f32)                 # + PE (pre-tiled)
    mask = w_ref[G_PE:G_PE + ROWS, d:d + ROWS].astype(f32)          # (ROWS, ROWS) additive

    # ---- encoder stack (post-LN, ReLU FFN) ----------------------------------
    for l in range(NUM_LAYERS):
        base = LAYER_BASE + l * LAYER_ROWS

        # fused QKV projection (1/sqrt(hd) folded into Wq / bq at pack time)
        wqkv = w_ref[base + L_WQKV:base + L_WQKV + d, :3 * d]       # (d, 3d) bf16
        qkv = jnp.dot(x.astype(bf16), wqkv, preferred_element_type=f32)
        qkv = qkv + vec(base + L_VEC + 0, 3 * d)                    # (ROWS, 3d) f32

        q_b  = qkv[:, 0 * d:1 * d].astype(bf16)                     # (ROWS, d)
        kT_b = qkv[:, 1 * d:2 * d].T.astype(bf16)                   # (d, ROWS): 1 transpose / layer
        v_b  = qkv[:, 2 * d:3 * d].astype(bf16)
        wo   = w_ref[base + L_WO:base + L_WO + d, :d]               # (d, d) bf16

        # multi-head attention: accumulate each head through Wo_h (no concat)
        attn = jnp.zeros((ROWS, d), f32)
        for h in range(NHEAD):
            lo = h * hd
            s = jnp.dot(q_b[:, lo:lo + hd], kT_b[lo:lo + hd, :],
                        preferred_element_type=f32)                 # (ROWS, ROWS)
            s = s + mask                                            # block-diag additive mask
            s = s - jnp.max(s, axis=-1, keepdims=True)
            p = jnp.exp(s)
            p = p * pl.reciprocal(jnp.sum(p, axis=-1, keepdims=True), approx=True)
            oh = jnp.dot(p.astype(bf16), v_b[:, lo:lo + hd],
                         preferred_element_type=f32)                # (ROWS, hd)
            attn = attn + jnp.dot(oh.astype(bf16), wo[lo:lo + hd, :],
                                  preferred_element_type=f32)
        attn = attn + vec(base + L_VEC + 1, d)                      # + bo

        x = _layer_norm(x + attn,
                        vec(base + L_VEC + 2, d), vec(base + L_VEC + 3, d))

        # feed-forward (ReLU)
        w1 = w_ref[base + L_W1:base + L_W1 + d, :dff]               # (d, dff) bf16
        h1 = jnp.dot(x.astype(bf16), w1, preferred_element_type=f32)
        h1 = jnp.maximum(h1 + vec(base + L_VEC + 4, dff), 0.0)
        w2 = w_ref[base + L_W2:base + L_W2 + dff, :d]               # (dff, d) bf16
        h2 = jnp.dot(h1.astype(bf16), w2, preferred_element_type=f32)
        h2 = h2 + vec(base + L_VEC + 5, d)

        x = _layer_norm(x + h2,
                        vec(base + L_VEC + 6, d), vec(base + L_VEC + 7, d))

    # ---- output projection on only the last PRED_LEN rows of each batch ----
    sel = jnp.concatenate(
        [x[b * SEQ_LEN + SEQ_LEN - PRED_LEN:(b + 1) * SEQ_LEN, :]
         for b in range(BATCH)], axis=0)                            # (OUT_ROWS, d)
    w_out = w_ref[W_OUT_OFF:W_OUT_OFF + d, :F]                      # (d, F) bf16
    out_ref[...] = (jnp.dot(sel.astype(bf16), w_out, preferred_element_type=f32)
                    + vec(G_VEC + 1, F))


def transformer_time_series(src, slab):
    """src: (B, S, input_size) f32, slab: packed (TOTAL_ROWS, 128) bf16
       -> (B, pred_len, input_size) f32"""
    B, S, F = src.shape
    out2d = pl.pallas_call(
        transformer_kernel,
        out_shape=jax.ShapeDtypeStruct((B * PRED_LEN, F), jnp.float32),
        in_specs=[pl.BlockSpec(memory_space=pltpu.MemorySpace.VMEM),
                  pl.BlockSpec(memory_space=pltpu.MemorySpace.VMEM)],
        out_specs=pl.BlockSpec(memory_space=pltpu.MemorySpace.VMEM),
    )(src.reshape(B * S, F), slab)
    return out2d.reshape(B, PRED_LEN, F)


# ---------------- host-side parameter construction / one-time packing --------
def make_positional_encoding(seq_len, d_model):
    position = jnp.arange(seq_len, dtype=jnp.float32)[:, None]
    div_term = jnp.exp(jnp.arange(0, d_model, 2, dtype=jnp.float32)
                       * -(math.log(10000.0) / d_model))
    pe = jnp.zeros((seq_len, d_model), dtype=jnp.float32)
    pe = pe.at[:, 0::2].set(jnp.sin(position * div_term))
    pe = pe.at[:, 1::2].set(jnp.cos(position * div_term))
    return pe


def init_params(key):
    ks = jax.random.split(key, 16)
    s = 0.05
    L, d, dff, F = NUM_LAYERS, D_MODEL, DIM_FF, INPUT_SIZE
    return {
        "pe":    make_positional_encoding(SEQ_LEN, d),
        # global projections (PyTorch (out, in) layout)
        "w_in":  s * jax.random.normal(ks[0], (d, F), jnp.float32),
        "b_in":  s * jax.random.normal(ks[1], (1, d), jnp.float32),
        "w_out": s * jax.random.normal(ks[2], (F, d), jnp.float32),
        "b_out": s * jax.random.normal(ks[3], (1, F), jnp.float32),
        # per-layer attention (PyTorch (out, in) layout)
        "wq":    s * jax.random.normal(ks[4], (L, d, d), jnp.float32),
        "wk":    s * jax.random.normal(ks[5], (L, d, d), jnp.float32),
        "wv":    s * jax.random.normal(ks[6], (L, d, d), jnp.float32),
        "bq":    s * jax.random.normal(ks[7], (L, 1, d), jnp.float32),
        "bk":    s * jax.random.normal(ks[8], (L, 1, d), jnp.float32),
        "bv":    s * jax.random.normal(ks[9], (L, 1, d), jnp.float32),
        "wo":    s * jax.random.normal(ks[10], (L, d, d), jnp.float32),
        "bo":    s * jax.random.normal(ks[11], (L, 1, d), jnp.float32),
        # per-layer FFN
        "w1":    s * jax.random.normal(ks[12], (L, dff, d), jnp.float32),
        "b1":    s * jax.random.normal(ks[13], (L, 1, dff), jnp.float32),
        "w2":    s * jax.random.normal(ks[14], (L, d, dff), jnp.float32),
        "b2":    s * jax.random.normal(ks[15], (L, 1, d), jnp.float32),
        # layer norms
        "g1":    jnp.ones((L, 1, d), jnp.float32),
        "bt1":   jnp.zeros((L, 1, d), jnp.float32),
        "g2":    jnp.ones((L, 1, d), jnp.float32),
        "bt2":   jnp.zeros((L, 1, d), jnp.float32),
    }


def pack_params(p):
    """One-time packing: transpose weights, fuse QKV, fold 1/sqrt(hd) into Q,
    pre-tile PE, precompute the additive block-diagonal mask, and lay everything
    out in a single lane-dense (TOTAL_ROWS, 128) bf16 slab."""
    scale = 1.0 / math.sqrt(HEAD_DIM)
    slab = jnp.zeros((TOTAL_ROWS, LANES), jnp.float32)

    def put(s, r, c, blk):
        return s.at[r:r + blk.shape[0], c:c + blk.shape[1]].set(blk)

    slab = put(slab, G_WIN, 0, p["w_in"].T)                          # (F, d)
    slab = put(slab, G_PE, 0, jnp.tile(p["pe"], (BATCH, 1)))         # (ROWS, d)
    rb = jnp.arange(ROWS)[:, None] // SEQ_LEN
    cb = jnp.arange(ROWS)[None, :] // SEQ_LEN
    mask = jnp.where(rb == cb, 0.0, NEG_INF).astype(jnp.float32)     # (ROWS, ROWS)
    slab = put(slab, G_PE, D_MODEL, mask)
    slab = put(slab, G_VEC + 0, 0, p["b_in"])                        # (1, d)
    slab = put(slab, G_VEC + 1, 0, p["b_out"])                       # (1, F)

    for l in range(NUM_LAYERS):
        base = LAYER_BASE + l * LAYER_ROWS
        wqkv = jnp.concatenate(
            [p["wq"][l].T * scale, p["wk"][l].T, p["wv"][l].T], axis=1)   # (d, 3d)
        bqkv = jnp.concatenate(
            [p["bq"][l] * scale, p["bk"][l], p["bv"][l]], axis=1)         # (1, 3d)
        slab = put(slab, base + L_WQKV, 0, wqkv)
        slab = put(slab, base + L_WO, 0, p["wo"][l].T)                    # (d, d)
        slab = put(slab, base + L_W1, 0, p["w1"][l].T)                    # (d, dff)
        slab = put(slab, base + L_W2, 0, p["w2"][l].T)                    # (dff, d)
        vecs = [bqkv, p["bo"][l], p["g1"][l], p["bt1"][l],
                p["b1"][l], p["b2"][l], p["g2"][l], p["bt2"][l]]
        for i, v in enumerate(vecs):
            slab = put(slab, base + L_VEC + i, 0, v)

    slab = put(slab, W_OUT_OFF, 0, p["w_out"].T)                     # (d, F)
    assert slab.shape == (TOTAL_ROWS, LANES), slab.shape
    # bf16 storage: matmul operands run native bf16 on the MXU; small vectors
    # (biases / LN / PE / mask) are promoted back to f32 inside the kernel.
    return slab.astype(jnp.bfloat16)


if __name__ == "__main__":
    key = jax.random.PRNGKey(0)
    k_src, k_par = jax.random.split(key)

    src = jax.random.normal(k_src, (BATCH, SEQ_LEN, INPUT_SIZE), jnp.float32)
    params = init_params(k_par)
    slab = jax.block_until_ready(pack_params(params))       # one-time packing

    out = jax.block_until_ready(transformer_time_series(src, slab))

    assert out.shape == (BATCH, PRED_LEN, INPUT_SIZE), out.shape
    assert bool(jnp.all(jnp.isfinite(out)))
    print("KERNEL_OK")
</pallas_src>

<mosaic_0001>
module attributes {stable_mosaic.version = 11 : i64} {
  func.func @transformer_kernel(%arg0: memref<16x4xf32, #tpu.memory_space<vmem>>, %arg1: memref<400x128xbf16, #tpu.memory_space<vmem>>, %arg2: memref<8x4xf32, #tpu.memory_space<vmem>>) attributes {dimension_semantics = [], scalar_prefetch = 0 : i64, scratch_operands = 0 : i64, tpu.core_type = #tpu.core_type<tc>} {
    %c0 = arith.constant 0 : index
    %c0_0 = arith.constant 0 : index
    %0 = vector.load %arg1[%c0, %c0_0] : memref<400x128xbf16, #tpu.memory_space<vmem>>, vector<4x32xbf16>
    %c0_1 = arith.constant 0 : index
    %c0_2 = arith.constant 0 : index
    %1 = vector.load %arg0[%c0_1, %c0_2] : memref<16x4xf32, #tpu.memory_space<vmem>>, vector<16x4xf32>
    %2 = arith.truncf %1 : vector<16x4xf32> to vector<16x4xbf16>
    %cst = arith.constant dense<0.000000e+00> : vector<16x32xf32>
    %3 = tpu.matmul %2, %0, %cst {dimension_numbers = #tpu.dot_dimension_numbers<[1], [0], [0], [1], [0, 0, 1, 1], [], []>} : vector<16x4xbf16>, vector<4x32xbf16>, vector<16x32xf32> -> vector<16x32xf32>
    %c24 = arith.constant 24 : index
    %c0_3 = arith.constant 0 : index
    %4 = vector.load %arg1[%c24, %c0_3] : memref<400x128xbf16, #tpu.memory_space<vmem>>, vector<1x32xbf16>
    %5 = arith.extf %4 : vector<1x32xbf16> to vector<1x32xf32>
    %6 = vector.broadcast %5 : vector<1x32xf32> to vector<16x32xf32>
    %7 = arith.addf %3, %6 : vector<16x32xf32>
    %c8 = arith.constant 8 : index
    %c0_4 = arith.constant 0 : index
    %8 = vector.load %arg1[%c8, %c0_4] : memref<400x128xbf16, #tpu.memory_space<vmem>>, vector<16x32xbf16>
    %9 = arith.extf %8 : vector<16x32xbf16> to vector<16x32xf32>
    %10 = arith.addf %7, %9 : vector<16x32xf32>
    %c8_5 = arith.constant 8 : index
    %c32 = arith.constant 32 : index
    %11 = vector.load %arg1[%c8_5, %c32] : memref<400x128xbf16, #tpu.memory_space<vmem>>, vector<16x16xbf16>
    %12 = arith.extf %11 : vector<16x16xbf16> to vector<16x16xf32>
    %c32_6 = arith.constant 32 : index
    %c0_7 = arith.constant 0 : index
    %13 = vector.load %arg1[%c32_6, %c0_7] : memref<400x128xbf16, #tpu.memory_space<vmem>>, vector<32x96xbf16>
    %14 = arith.truncf %10 : vector<16x32xf32> to vector<16x32xbf16>
    %cst_8 = arith.constant dense<0.000000e+00> : vector<16x96xf32>
    %15 = tpu.matmul %14, %13, %cst_8 {dimension_numbers = #tpu.dot_dimension_numbers<[1], [0], [0], [1], [0, 0, 1, 1], [], []>} : vector<16x32xbf16>, vector<32x96xbf16>, vector<16x96xf32> -> vector<16x96xf32>
    %c192 = arith.constant 192 : index
    %c0_9 = arith.constant 0 : index
    %16 = vector.load %arg1[%c192, %c0_9] : memref<400x128xbf16, #tpu.memory_space<vmem>>, vector<1x96xbf16>
    %17 = arith.extf %16 : vector<1x96xbf16> to vector<1x96xf32>
    %18 = vector.broadcast %17 : vector<1x96xf32> to vector<16x96xf32>
    %19 = arith.addf %15, %18 : vector<16x96xf32>
    %20 = vector.extract_strided_slice %19 {offsets = [0, 0], sizes = [16, 32], strides = [1, 1]} : vector<16x96xf32> to vector<16x32xf32>
    %21 = arith.truncf %20 : vector<16x32xf32> to vector<16x32xbf16>
    %22 = vector.extract_strided_slice %19 {offsets = [0, 32], sizes = [16, 32], strides = [1, 1]} : vector<16x96xf32> to vector<16x32xf32>
    %23 = tpu.transpose %22, [1, 0] : vector<16x32xf32> -> vector<32x16xf32>
    %24 = arith.truncf %23 : vector<32x16xf32> to vector<32x16xbf16>
    %25 = vector.extract_strided_slice %19 {offsets = [0, 64], sizes = [16, 32], strides = [1, 1]} : vector<16x96xf32> to vector<16x32xf32>
    %26 = arith.truncf %25 : vector<16x32xf32> to vector<16x32xbf16>
    %c64 = arith.constant 64 : index
    %c0_10 = arith.constant 0 : index
    %27 = vector.load %arg1[%c64, %c0_10] : memref<400x128xbf16, #tpu.memory_space<vmem>>, vector<32x32xbf16>
    %cst_11 = arith.constant 0.000000e+00 : f32
    %28 = vector.broadcast %cst_11 : f32 to vector<16x32xf32>
    %29 = vector.extract_strided_slice %21 {offsets = [0, 0], sizes = [16, 8], strides = [1, 1]} : vector<16x32xbf16> to vector<16x8xbf16>
    %30 = vector.extract_strided_slice %24 {offsets = [0, 0], sizes = [8, 16], strides = [1, 1]} : vector<32x16xbf16> to vector<8x16xbf16>
    %cst_12 = arith.constant dense<0.000000e+00> : vector<16x16xf32>
    %31 = tpu.matmul %29, %30, %cst_12 {dimension_numbers = #tpu.dot_dimension_numbers<[1], [0], [0], [1], [0, 0, 1, 1], [], []>} : vector<16x8xbf16>, vector<8x16xbf16>, vector<16x16xf32> -> vector<16x16xf32>
    %32 = arith.addf %31, %12 : vector<16x16xf32>
    %cst_13 = arith.constant dense<0xFF800000> : vector<16xf32>
    %33 = vector.multi_reduction <maximumf>, %32, %cst_13 [1] : vector<16x16xf32> to vector<16xf32>
    %34 = vector.shape_cast %33 : vector<16xf32> to vector<16x1xf32>
    %35 = vector.broadcast %34 : vector<16x1xf32> to vector<16x16xf32>
    %36 = arith.subf %32, %35 : vector<16x16xf32>
    %37 = math.exp %36 : vector<16x16xf32>
    %cst_14 = arith.constant dense<0.000000e+00> : vector<16xf32>
    %38 = vector.multi_reduction <add>, %37, %cst_14 [1] : vector<16x16xf32> to vector<16xf32>
    %39 = vector.shape_cast %38 : vector<16xf32> to vector<16x1xf32>
    %40 = tpu.reciprocal %39 {approx = true} : vector<16x1xf32> -> vector<16x1xf32>
    %41 = vector.broadcast %40 : vector<16x1xf32> to vector<16x16xf32>
    %42 = arith.mulf %37, %41 : vector<16x16xf32>
    %43 = arith.truncf %42 : vector<16x16xf32> to vector<16x16xbf16>
    %44 = vector.extract_strided_slice %26 {offsets = [0, 0], sizes = [16, 8], strides = [1, 1]} : vector<16x32xbf16> to vector<16x8xbf16>
    %cst_15 = arith.constant dense<0.000000e+00> : vector<16x8xf32>
    %45 = tpu.matmul %43, %44, %cst_15 {dimension_numbers = #tpu.dot_dimension_numbers<[1], [0], [0], [1], [0, 0, 1, 1], [], []>} : vector<16x16xbf16>, vector<16x8xbf16>, vector<16x8xf32> -> vector<16x8xf32>
    %46 = arith.truncf %45 : vector<16x8xf32> to vector<16x8xbf16>
    %47 = vector.extract_strided_slice %27 {offsets = [0, 0], sizes = [8, 32], strides = [1, 1]} : vector<32x32xbf16> to vector<8x32xbf16>
    %cst_16 = arith.constant dense<0.000000e+00> : vector<16x32xf32>
    %48 = tpu.matmul %46, %47, %cst_16 {dimension_numbers = #tpu.dot_dimension_numbers<[1], [0], [0], [1], [0, 0, 1, 1], [], []>} : vector<16x8xbf16>, vector<8x32xbf16>, vector<16x32xf32> -> vector<16x32xf32>
    %49 = arith.addf %28, %48 : vector<16x32xf32>
    %50 = vector.extract_strided_slice %21 {offsets = [0, 8], sizes = [16, 8], strides = [1, 1]} : vector<16x32xbf16> to vector<16x8xbf16>
    %51 = vector.extract_strided_slice %24 {offsets = [8, 0], sizes = [8, 16], strides = [1, 1]} : vector<32x16xbf16> to vector<8x16xbf16>
    %cst_17 = arith.constant dense<0.000000e+00> : vector<16x16xf32>
    %52 = tpu.matmul %50, %51, %cst_17 {dimension_numbers = #tpu.dot_dimension_numbers<[1], [0], [0], [1], [0, 0, 1, 1], [], []>} : vector<16x8xbf16>, vector<8x16xbf16>, vector<16x16xf32> -> vector<16x16xf32>
    %53 = arith.addf %52, %12 : vector<16x16xf32>
    %cst_18 = arith.constant dense<0xFF800000> : vector<16xf32>
    %54 = vector.multi_reduction <maximumf>, %53, %cst_18 [1] : vector<16x16xf32> to vector<16xf32>
    %55 = vector.shape_cast %54 : vector<16xf32> to vector<16x1xf32>
    %56 = vector.broadcast %55 : vector<16x1xf32> to vector<16x16xf32>
    %57 = arith.subf %53, %56 : vector<16x16xf32>
    %58 = math.exp %57 : vector<16x16xf32>
    %cst_19 = arith.constant dense<0.000000e+00> : vector<16xf32>
    %59 = vector.multi_reduction <add>, %58, %cst_19 [1] : vector<16x16xf32> to vector<16xf32>
    %60 = vector.shape_cast %59 : vector<16xf32> to vector<16x1xf32>
    %61 = tpu.reciprocal %60 {approx = true} : vector<16x1xf32> -> vector<16x1xf32>
    %62 = vector.broadcast %61 : vector<16x1xf32> to vector<16x16xf32>
    %63 = arith.mulf %58, %62 : vector<16x16xf32>
    %64 = arith.truncf %63 : vector<16x16xf32> to vector<16x16xbf16>
    %65 = vector.extract_strided_slice %26 {offsets = [0, 8], sizes = [16, 8], strides = [1, 1]} : vector<16x32xbf16> to vector<16x8xbf16>
    %cst_20 = arith.constant dense<0.000000e+00> : vector<16x8xf32>
    %66 = tpu.matmul %64, %65, %cst_20 {dimension_numbers = #tpu.dot_dimension_numbers<[1], [0], [0], [1], [0, 0, 1, 1], [], []>} : vector<16x16xbf16>, vector<16x8xbf16>, vector<16x8xf32> -> vector<16x8xf32>
    %67 = arith.truncf %66 : vector<16x8xf32> to vector<16x8xbf16>
    %68 = vector.extract_strided_slice %27 {offsets = [8, 0], sizes = [8, 32], strides = [1, 1]} : vector<32x32xbf16> to vector<8x32xbf16>
    %cst_21 = arith.constant dense<0.000000e+00> : vector<16x32xf32>
    %69 = tpu.matmul %67, %68, %cst_21 {dimension_numbers = #tpu.dot_dimension_numbers<[1], [0], [0], [1], [0, 0, 1, 1], [], []>} : vector<16x8xbf16>, vector<8x32xbf16>, vector<16x32xf32> -> vector<16x32xf32>
    %70 = arith.addf %49, %69 : vector<16x32xf32>
    %71 = vector.extract_strided_slice %21 {offsets = [0, 16], sizes = [16, 8], strides = [1, 1]} : vector<16x32xbf16> to vector<16x8xbf16>
    %72 = vector.extract_strided_slice %24 {offsets = [16, 0], sizes = [8, 16], strides = [1, 1]} : vector<32x16xbf16> to vector<8x16xbf16>
    %cst_22 = arith.constant dense<0.000000e+00> : vector<16x16xf32>
    %73 = tpu.matmul %71, %72, %cst_22 {dimension_numbers = #tpu.dot_dimension_numbers<[1], [0], [0], [1], [0, 0, 1, 1], [], []>} : vector<16x8xbf16>, vector<8x16xbf16>, vector<16x16xf32> -> vector<16x16xf32>
    %74 = arith.addf %73, %12 : vector<16x16xf32>
    %cst_23 = arith.constant dense<0xFF800000> : vector<16xf32>
    %75 = vector.multi_reduction <maximumf>, %74, %cst_23 [1] : vector<16x16xf32> to vector<16xf32>
    %76 = vector.shape_cast %75 : vector<16xf32> to vector<16x1xf32>
    %77 = vector.broadcast %76 : vector<16x1xf32> to vector<16x16xf32>
    %78 = arith.subf %74, %77 : vector<16x16xf32>
    %79 = math.exp %78 : vector<16x16xf32>
    %cst_24 = arith.constant dense<0.000000e+00> : vector<16xf32>
    %80 = vector.multi_reduction <add>, %79, %cst_24 [1] : vector<16x16xf32> to vector<16xf32>
    %81 = vector.shape_cast %80 : vector<16xf32> to vector<16x1xf32>
    %82 = tpu.reciprocal %81 {approx = true} : vector<16x1xf32> -> vector<16x1xf32>
    %83 = vector.broadcast %82 : vector<16x1xf32> to vector<16x16xf32>
    %84 = arith.mulf %79, %83 : vector<16x16xf32>
    %85 = arith.truncf %84 : vector<16x16xf32> to vector<16x16xbf16>
    %86 = vector.extract_strided_slice %26 {offsets = [0, 16], sizes = [16, 8], strides = [1, 1]} : vector<16x32xbf16> to vector<16x8xbf16>
    %cst_25 = arith.constant dense<0.000000e+00> : vector<16x8xf32>
    %87 = tpu.matmul %85, %86, %cst_25 {dimension_numbers = #tpu.dot_dimension_numbers<[1], [0], [0], [1], [0, 0, 1, 1], [], []>} : vector<16x16xbf16>, vector<16x8xbf16>, vector<16x8xf32> -> vector<16x8xf32>
    %88 = arith.truncf %87 : vector<16x8xf32> to vector<16x8xbf16>
    %89 = vector.extract_strided_slice %27 {offsets = [16, 0], sizes = [8, 32], strides = [1, 1]} : vector<32x32xbf16> to vector<8x32xbf16>
    %cst_26 = arith.constant dense<0.000000e+00> : vector<16x32xf32>
    %90 = tpu.matmul %88, %89, %cst_26 {dimension_numbers = #tpu.dot_dimension_numbers<[1], [0], [0], [1], [0, 0, 1, 1], [], []>} : vector<16x8xbf16>, vector<8x32xbf16>, vector<16x32xf32> -> vector<16x32xf32>
    %91 = arith.addf %70, %90 : vector<16x32xf32>
    %92 = vector.extract_strided_slice %21 {offsets = [0, 24], sizes = [16, 8], strides = [1, 1]} : vector<16x32xbf16> to vector<16x8xbf16>
    %93 = vector.extract_strided_slice %24 {offsets = [24, 0], sizes = [8, 16], strides = [1, 1]} : vector<32x16xbf16> to vector<8x16xbf16>
    %cst_27 = arith.constant dense<0.000000e+00> : vector<16x16xf32>
    %94 = tpu.matmul %92, %93, %cst_27 {dimension_numbers = #tpu.dot_dimension_numbers<[1], [0], [0], [1], [0, 0, 1, 1], [], []>} : vector<16x8xbf16>, vector<8x16xbf16>, vector<16x16xf32> -> vector<16x16xf32>
    %95 = arith.addf %94, %12 : vector<16x16xf32>
    %cst_28 = arith.constant dense<0xFF800000> : vector<16xf32>
    %96 = vector.multi_reduction <maximumf>, %95, %cst_28 [1] : vector<16x16xf32> to vector<16xf32>
    %97 = vector.shape_cast %96 : vector<16xf32> to vector<16x1xf32>
    %98 = vector.broadcast %97 : vector<16x1xf32> to vector<16x16xf32>
    %99 = arith.subf %95, %98 : vector<16x16xf32>
    %100 = math.exp %99 : vector<16x16xf32>
    %cst_29 = arith.constant dense<0.000000e+00> : vector<16xf32>
    %101 = vector.multi_reduction <add>, %100, %cst_29 [1] : vector<16x16xf32> to vector<16xf32>
    %102 = vector.shape_cast %101 : vector<16xf32> to vector<16x1xf32>
    %103 = tpu.reciprocal %102 {approx = true} : vector<16x1xf32> -> vector<16x1xf32>
    %104 = vector.broadcast %103 : vector<16x1xf32> to vector<16x16xf32>
    %105 = arith.mulf %100, %104 : vector<16x16xf32>
    %106 = arith.truncf %105 : vector<16x16xf32> to vector<16x16xbf16>
    %107 = vector.extract_strided_slice %26 {offsets = [0, 24], sizes = [16, 8], strides = [1, 1]} : vector<16x32xbf16> to vector<16x8xbf16>
    %cst_30 = arith.constant dense<0.000000e+00> : vector<16x8xf32>
    %108 = tpu.matmul %106, %107, %cst_30 {dimension_numbers = #tpu.dot_dimension_numbers<[1], [0], [0], [1], [0, 0, 1, 1], [], []>} : vector<16x16xbf16>, vector<16x8xbf16>, vector<16x8xf32> -> vector<16x8xf32>
    %109 = arith.truncf %108 : vector<16x8xf32> to vector<16x8xbf16>
    %110 = vector.extract_strided_slice %27 {offsets = [24, 0], sizes = [8, 32], strides = [1, 1]} : vector<32x32xbf16> to vector<8x32xbf16>
    %cst_31 = arith.constant dense<0.000000e+00> : vector<16x32xf32>
    %111 = tpu.matmul %109, %110, %cst_31 {dimension_numbers = #tpu.dot_dimension_numbers<[1], [0], [0], [1], [0, 0, 1, 1], [], []>} : vector<16x8xbf16>, vector<8x32xbf16>, vector<16x32xf32> -> vector<16x32xf32>
    %112 = arith.addf %91, %111 : vector<16x32xf32>
    %c193 = arith.constant 193 : index
    %c0_32 = arith.constant 0 : index
    %113 = vector.load %arg1[%c193, %c0_32] : memref<400x128xbf16, #tpu.memory_space<vmem>>, vector<1x32xbf16>
    %114 = arith.extf %113 : vector<1x32xbf16> to vector<1x32xf32>
    %115 = vector.broadcast %114 : vector<1x32xf32> to vector<16x32xf32>
    %116 = arith.addf %112, %115 : vector<16x32xf32>
    %117 = arith.addf %10, %116 : vector<16x32xf32>
    %c194 = arith.constant 194 : index
    %c0_33 = arith.constant 0 : index
    %118 = vector.load %arg1[%c194, %c0_33] : memref<400x128xbf16, #tpu.memory_space<vmem>>, vector<1x32xbf16>
    %119 = arith.extf %118 : vector<1x32xbf16> to vector<1x32xf32>
    %c195 = arith.constant 195 : index
    %c0_34 = arith.constant 0 : index
    %120 = vector.load %arg1[%c195, %c0_34] : memref<400x128xbf16, #tpu.memory_space<vmem>>, vector<1x32xbf16>
    %121 = arith.extf %120 : vector<1x32xbf16> to vector<1x32xf32>
    %cst_35 = arith.constant dense<0.000000e+00> : vector<16xf32>
    %122 = vector.multi_reduction <add>, %117, %cst_35 [1] : vector<16x32xf32> to vector<16xf32>
    %123 = vector.shape_cast %122 : vector<16xf32> to vector<16x1xf32>
    %cst_36 = arith.constant 3.200000e+01 : f32
    %124 = vector.broadcast %cst_36 : f32 to vector<16x1xf32>
    %125 = arith.divf %123, %124 : vector<16x1xf32>
    %126 = vector.broadcast %125 : vector<16x1xf32> to vector<16x32xf32>
    %127 = arith.subf %117, %126 : vector<16x32xf32>
    %128 = arith.mulf %127, %127 : vector<16x32xf32>
    %cst_37 = arith.constant dense<0.000000e+00> : vector<16xf32>
    %129 = vector.multi_reduction <add>, %128, %cst_37 [1] : vector<16x32xf32> to vector<16xf32>
    %130 = vector.shape_cast %129 : vector<16xf32> to vector<16x1xf32>
    %cst_38 = arith.constant 3.200000e+01 : f32
    %131 = vector.broadcast %cst_38 : f32 to vector<16x1xf32>
    %132 = arith.divf %130, %131 : vector<16x1xf32>
    %133 = vector.broadcast %125 : vector<16x1xf32> to vector<16x32xf32>
    %134 = arith.subf %117, %133 : vector<16x32xf32>
    %cst_39 = arith.constant 9.99999974E-6 : f32
    %135 = vector.broadcast %cst_39 : f32 to vector<16x1xf32>
    %136 = arith.addf %132, %135 : vector<16x1xf32>
    %137 = math.rsqrt %136 : vector<16x1xf32>
    %138 = vector.broadcast %137 : vector<16x1xf32> to vector<16x32xf32>
    %139 = arith.mulf %134, %138 : vector<16x32xf32>
    %140 = vector.broadcast %119 : vector<1x32xf32> to vector<16x32xf32>
    %141 = arith.mulf %139, %140 : vector<16x32xf32>
    %142 = vector.broadcast %121 : vector<1x32xf32> to vector<16x32xf32>
    %143 = arith.addf %141, %142 : vector<16x32xf32>
    %c96 = arith.constant 96 : index
    %c0_40 = arith.constant 0 : index
    %144 = vector.load %arg1[%c96, %c0_40] : memref<400x128xbf16, #tpu.memory_space<vmem>>, vector<32x64xbf16>
    %145 = arith.truncf %143 : vector<16x32xf32> to vector<16x32xbf16>
    %cst_41 = arith.constant dense<0.000000e+00> : vector<16x64xf32>
    %146 = tpu.matmul %145, %144, %cst_41 {dimension_numbers = #tpu.dot_dimension_numbers<[1], [0], [0], [1], [0, 0, 1, 1], [], []>} : vector<16x32xbf16>, vector<32x64xbf16>, vector<16x64xf32> -> vector<16x64xf32>
    %c196 = arith.constant 196 : index
    %c0_42 = arith.constant 0 : index
    %147 = vector.load %arg1[%c196, %c0_42] : memref<400x128xbf16, #tpu.memory_space<vmem>>, vector<1x64xbf16>
    %148 = arith.extf %147 : vector<1x64xbf16> to vector<1x64xf32>
    %149 = vector.broadcast %148 : vector<1x64xf32> to vector<16x64xf32>
    %150 = arith.addf %146, %149 : vector<16x64xf32>
    %cst_43 = arith.constant 0.000000e+00 : f32
    %151 = vector.broadcast %cst_43 : f32 to vector<16x64xf32>
    %152 = arith.maximumf %150, %151 : vector<16x64xf32>
    %c128 = arith.constant 128 : index
    %c0_44 = arith.constant 0 : index
    %153 = vector.load %arg1[%c128, %c0_44] : memref<400x128xbf16, #tpu.memory_space<vmem>>, vector<64x32xbf16>
    %154 = arith.truncf %152 : vector<16x64xf32> to vector<16x64xbf16>
    %cst_45 = arith.constant dense<0.000000e+00> : vector<16x32xf32>
    %155 = tpu.matmul %154, %153, %cst_45 {dimension_numbers = #tpu.dot_dimension_numbers<[1], [0], [0], [1], [0, 0, 1, 1], [], []>} : vector<16x64xbf16>, vector<64x32xbf16>, vector<16x32xf32> -> vector<16x32xf32>
    %c197 = arith.constant 197 : index
    %c0_46 = arith.constant 0 : index
    %156 = vector.load %arg1[%c197, %c0_46] : memref<400x128xbf16, #tpu.memory_space<vmem>>, vector<1x32xbf16>
    %157 = arith.extf %156 : vector<1x32xbf16> to vector<1x32xf32>
    %158 = vector.broadcast %157 : vector<1x32xf32> to vector<16x32xf32>
    %159 = arith.addf %155, %158 : vector<16x32xf32>
    %160 = arith.addf %143, %159 : vector<16x32xf32>
    %c198 = arith.constant 198 : index
    %c0_47 = arith.constant 0 : index
    %161 = vector.load %arg1[%c198, %c0_47] : memref<400x128xbf16, #tpu.memory_space<vmem>>, vector<1x32xbf16>
    %162 = arith.extf %161 : vector<1x32xbf16> to vector<1x32xf32>
    %c199 = arith.constant 199 : index
    %c0_48 = arith.constant 0 : index
    %163 = vector.load %arg1[%c199, %c0_48] : memref<400x128xbf16, #tpu.memory_space<vmem>>, vector<1x32xbf16>
    %164 = arith.extf %163 : vector<1x32xbf16> to vector<1x32xf32>
    %cst_49 = arith.constant dense<0.000000e+00> : vector<16xf32>
    %165 = vector.multi_reduction <add>, %160, %cst_49 [1] : vector<16x32xf32> to vector<16xf32>
    %166 = vector.shape_cast %165 : vector<16xf32> to vector<16x1xf32>
    %cst_50 = arith.constant 3.200000e+01 : f32
    %167 = vector.broadcast %cst_50 : f32 to vector<16x1xf32>
    %168 = arith.divf %166, %167 : vector<16x1xf32>
    %169 = vector.broadcast %168 : vector<16x1xf32> to vector<16x32xf32>
    %170 = arith.subf %160, %169 : vector<16x32xf32>
    %171 = arith.mulf %170, %170 : vector<16x32xf32>
    %cst_51 = arith.constant dense<0.000000e+00> : vector<16xf32>
    %172 = vector.multi_reduction <add>, %171, %cst_51 [1] : vector<16x32xf32> to vector<16xf32>
    %173 = vector.shape_cast %172 : vector<16xf32> to vector<16x1xf32>
    %cst_52 = arith.constant 3.200000e+01 : f32
    %174 = vector.broadcast %cst_52 : f32 to vector<16x1xf32>
    %175 = arith.divf %173, %174 : vector<16x1xf32>
    %176 = vector.broadcast %168 : vector<16x1xf32> to vector<16x32xf32>
    %177 = arith.subf %160, %176 : vector<16x32xf32>
    %cst_53 = arith.constant 9.99999974E-6 : f32
    %178 = vector.broadcast %cst_53 : f32 to vector<16x1xf32>
    %179 = arith.addf %175, %178 : vector<16x1xf32>
    %180 = math.rsqrt %179 : vector<16x1xf32>
    %181 = vector.broadcast %180 : vector<16x1xf32> to vector<16x32xf32>
    %182 = arith.mulf %177, %181 : vector<16x32xf32>
    %183 = vector.broadcast %162 : vector<1x32xf32> to vector<16x32xf32>
    %184 = arith.mulf %182, %183 : vector<16x32xf32>
    %185 = vector.broadcast %164 : vector<1x32xf32> to vector<16x32xf32>
    %186 = arith.addf %184, %185 : vector<16x32xf32>
    %c200 = arith.constant 200 : index
    %c0_54 = arith.constant 0 : index
    %187 = vector.load %arg1[%c200, %c0_54] : memref<400x128xbf16, #tpu.memory_space<vmem>>, vector<32x96xbf16>
    %188 = arith.truncf %186 : vector<16x32xf32> to vector<16x32xbf16>
    %cst_55 = arith.constant dense<0.000000e+00> : vector<16x96xf32>
    %189 = tpu.matmul %188, %187, %cst_55 {dimension_numbers = #tpu.dot_dimension_numbers<[1], [0], [0], [1], [0, 0, 1, 1], [], []>} : vector<16x32xbf16>, vector<32x96xbf16>, vector<16x96xf32> -> vector<16x96xf32>
    %c360 = arith.constant 360 : index
    %c0_56 = arith.constant 0 : index
    %190 = vector.load %arg1[%c360, %c0_56] : memref<400x128xbf16, #tpu.memory_space<vmem>>, vector<1x96xbf16>
    %191 = arith.extf %190 : vector<1x96xbf16> to vector<1x96xf32>
    %192 = vector.broadcast %191 : vector<1x96xf32> to vector<16x96xf32>
    %193 = arith.addf %189, %192 : vector<16x96xf32>
    %194 = vector.extract_strided_slice %193 {offsets = [0, 0], sizes = [16, 32], strides = [1, 1]} : vector<16x96xf32> to vector<16x32xf32>
    %195 = arith.truncf %194 : vector<16x32xf32> to vector<16x32xbf16>
    %196 = vector.extract_strided_slice %193 {offsets = [0, 32], sizes = [16, 32], strides = [1, 1]} : vector<16x96xf32> to vector<16x32xf32>
    %197 = tpu.transpose %196, [1, 0] : vector<16x32xf32> -> vector<32x16xf32>
    %198 = arith.truncf %197 : vector<32x16xf32> to vector<32x16xbf16>
    %199 = vector.extract_strided_slice %193 {offsets = [0, 64], sizes = [16, 32], strides = [1, 1]} : vector<16x96xf32> to vector<16x32xf32>
    %200 = arith.truncf %199 : vector<16x32xf32> to vector<16x32xbf16>
    %c232 = arith.constant 232 : index
    %c0_57 = arith.constant 0 : index
    %201 = vector.load %arg1[%c232, %c0_57] : memref<400x128xbf16, #tpu.memory_space<vmem>>, vector<32x32xbf16>
    %cst_58 = arith.constant 0.000000e+00 : f32
    %202 = vector.broadcast %cst_58 : f32 to vector<16x32xf32>
    %203 = vector.extract_strided_slice %195 {offsets = [0, 0], sizes = [16, 8], strides = [1, 1]} : vector<16x32xbf16> to vector<16x8xbf16>
    %204 = vector.extract_strided_slice %198 {offsets = [0, 0], sizes = [8, 16], strides = [1, 1]} : vector<32x16xbf16> to vector<8x16xbf16>
    %cst_59 = arith.constant dense<0.000000e+00> : vector<16x16xf32>
    %205 = tpu.matmul %203, %204, %cst_59 {dimension_numbers = #tpu.dot_dimension_numbers<[1], [0], [0], [1], [0, 0, 1, 1], [], []>} : vector<16x8xbf16>, vector<8x16xbf16>, vector<16x16xf32> -> vector<16x16xf32>
    %206 = arith.addf %205, %12 : vector<16x16xf32>
    %cst_60 = arith.constant dense<0xFF800000> : vector<16xf32>
    %207 = vector.multi_reduction <maximumf>, %206, %cst_60 [1] : vector<16x16xf32> to vector<16xf32>
    %208 = vector.shape_cast %207 : vector<16xf32> to vector<16x1xf32>
    %209 = vector.broadcast %208 : vector<16x1xf32> to vector<16x16xf32>
    %210 = arith.subf %206, %209 : vector<16x16xf32>
    %211 = math.exp %210 : vector<16x16xf32>
    %cst_61 = arith.constant dense<0.000000e+00> : vector<16xf32>
    %212 = vector.multi_reduction <add>, %211, %cst_61 [1] : vector<16x16xf32> to vector<16xf32>
    %213 = vector.shape_cast %212 : vector<16xf32> to vector<16x1xf32>
    %214 = tpu.reciprocal %213 {approx = true} : vector<16x1xf32> -> vector<16x1xf32>
    %215 = vector.broadcast %214 : vector<16x1xf32> to vector<16x16xf32>
    %216 = arith.mulf %211, %215 : vector<16x16xf32>
    %217 = arith.truncf %216 : vector<16x16xf32> to vector<16x16xbf16>
    %218 = vector.extract_strided_slice %200 {offsets = [0, 0], sizes = [16, 8], strides = [1, 1]} : vector<16x32xbf16> to vector<16x8xbf16>
    %cst_62 = arith.constant dense<0.000000e+00> : vector<16x8xf32>
    %219 = tpu.matmul %217, %218, %cst_62 {dimension_numbers = #tpu.dot_dimension_numbers<[1], [0], [0], [1], [0, 0, 1, 1], [], []>} : vector<16x16xbf16>, vector<16x8xbf16>, vector<16x8xf32> -> vector<16x8xf32>
    %220 = arith.truncf %219 : vector<16x8xf32> to vector<16x8xbf16>
    %221 = vector.extract_strided_slice %201 {offsets = [0, 0], sizes = [8, 32], strides = [1, 1]} : vector<32x32xbf16> to vector<8x32xbf16>
    %cst_63 = arith.constant dense<0.000000e+00> : vector<16x32xf32>
    %222 = tpu.matmul %220, %221, %cst_63 {dimension_numbers = #tpu.dot_dimension_numbers<[1], [0], [0], [1], [0, 0, 1, 1], [], []>} : vector<16x8xbf16>, vector<8x32xbf16>, vector<16x32xf32> -> vector<16x32xf32>
    %223 = arith.addf %202, %222 : vector<16x32xf32>
    %224 = vector.extract_strided_slice %195 {offsets = [0, 8], sizes = [16, 8], strides = [1, 1]} : vector<16x32xbf16> to vector<16x8xbf16>
    %225 = vector.extract_strided_slice %198 {offsets = [8, 0], sizes = [8, 16], strides = [1, 1]} : vector<32x16xbf16> to vector<8x16xbf16>
    %cst_64 = arith.constant dense<0.000000e+00> : vector<16x16xf32>
    %226 = tpu.matmul %224, %225, %cst_64 {dimension_numbers = #tpu.dot_dimension_numbers<[1], [0], [0], [1], [0, 0, 1, 1], [], []>} : vector<16x8xbf16>, vector<8x16xbf16>, vector<16x16xf32> -> vector<16x16xf32>
    %227 = arith.addf %226, %12 : vector<16x16xf32>
    %cst_65 = arith.constant dense<0xFF800000> : vector<16xf32>
    %228 = vector.multi_reduction <maximumf>, %227, %cst_65 [1] : vector<16x16xf32> to vector<16xf32>
    %229 = vector.shape_cast %228 : vector<16xf32> to vector<16x1xf32>
    %230 = vector.broadcast %229 : vector<16x1xf32> to vector<16x16xf32>
    %231 = arith.subf %227, %230 : vector<16x16xf32>
    %232 = math.exp %231 : vector<16x16xf32>
    %cst_66 = arith.constant dense<0.000000e+00> : vector<16xf32>
    %233 = vector.multi_reduction <add>, %232, %cst_66 [1] : vector<16x16xf32> to vector<16xf32>
    %234 = vector.shape_cast %233 : vector<16xf32> to vector<16x1xf32>
    %235 = tpu.reciprocal %234 {approx = true} : vector<16x1xf32> -> vector<16x1xf32>
    %236 = vector.broadcast %235 : vector<16x1xf32> to vector<16x16xf32>
    %237 = arith.mulf %232, %236 : vector<16x16xf32>
    %238 = arith.truncf %237 : vector<16x16xf32> to vector<16x16xbf16>
    %239 = vector.extract_strided_slice %200 {offsets = [0, 8], sizes = [16, 8], strides = [1, 1]} : vector<16x32xbf16> to vector<16x8xbf16>
    %cst_67 = arith.constant dense<0.000000e+00> : vector<16x8xf32>
    %240 = tpu.matmul %238, %239, %cst_67 {dimension_numbers = #tpu.dot_dimension_numbers<[1], [0], [0], [1], [0, 0, 1, 1], [], []>} : vector<16x16xbf16>, vector<16x8xbf16>, vector<16x8xf32> -> vector<16x8xf32>
    %241 = arith.truncf %240 : vector<16x8xf32> to vector<16x8xbf16>
    %242 = vector.extract_strided_slice %201 {offsets = [8, 0], sizes = [8, 32], strides = [1, 1]} : vector<32x32xbf16> to vector<8x32xbf16>
    %cst_68 = arith.constant dense<0.000000e+00> : vector<16x32xf32>
    %243 = tpu.matmul %241, %242, %cst_68 {dimension_numbers = #tpu.dot_dimension_numbers<[1], [0], [0], [1], [0, 0, 1, 1], [], []>} : vector<16x8xbf16>, vector<8x32xbf16>, vector<16x32xf32> -> vector<16x32xf32>
    %244 = arith.addf %223, %243 : vector<16x32xf32>
    %245 = vector.extract_strided_slice %195 {offsets = [0, 16], sizes = [16, 8], strides = [1, 1]} : vector<16x32xbf16> to vector<16x8xbf16>
    %246 = vector.extract_strided_slice %198 {offsets = [16, 0], sizes = [8, 16], strides = [1, 1]} : vector<32x16xbf16> to vector<8x16xbf16>
    %cst_69 = arith.constant dense<0.000000e+00> : vector<16x16xf32>
    %247 = tpu.matmul %245, %246, %cst_69 {dimension_numbers = #tpu.dot_dimension_numbers<[1], [0], [0], [1], [0, 0, 1, 1], [], []>} : vector<16x8xbf16>, vector<8x16xbf16>, vector<16x16xf32> -> vector<16x16xf32>
    %248 = arith.addf %247, %12 : vector<16x16xf32>
    %cst_70 = arith.constant dense<0xFF800000> : vector<16xf32>
    %249 = vector.multi_reduction <maximumf>, %248, %cst_70 [1] : vector<16x16xf32> to vector<16xf32>
    %250 = vector.shape_cast %249 : vector<16xf32> to vector<16x1xf32>
    %251 = vector.broadcast %250 : vector<16x1xf32> to vector<16x16xf32>
    %252 = arith.subf %248, %251 : vector<16x16xf32>
    %253 = math.exp %252 : vector<16x16xf32>
    %cst_71 = arith.constant dense<0.000000e+00> : vector<16xf32>
    %254 = vector.multi_reduction <add>, %253, %cst_71 [1] : vector<16x16xf32> to vector<16xf32>
    %255 = vector.shape_cast %254 : vector<16xf32> to vector<16x1xf32>
    %256 = tpu.reciprocal %255 {approx = true} : vector<16x1xf32> -> vector<16x1xf32>
    %257 = vector.broadcast %256 : vector<16x1xf32> to vector<16x16xf32>
    %258 = arith.mulf %253, %257 : vector<16x16xf32>
    %259 = arith.truncf %258 : vector<16x16xf32> to vector<16x16xbf16>
    %260 = vector.extract_strided_slice %200 {offsets = [0, 16], sizes = [16, 8], strides = [1, 1]} : vector<16x32xbf16> to vector<16x8xbf16>
    %cst_72 = arith.constant dense<0.000000e+00> : vector<16x8xf32>
    %261 = tpu.matmul %259, %260, %cst_72 {dimension_numbers = #tpu.dot_dimension_numbers<[1], [0], [0], [1], [0, 0, 1, 1], [], []>} : vector<16x16xbf16>, vector<16x8xbf16>, vector<16x8xf32> -> vector<16x8xf32>
    %262 = arith.truncf %261 : vector<16x8xf32> to vector<16x8xbf16>
    %263 = vector.extract_strided_slice %201 {offsets = [16, 0], sizes = [8, 32], strides = [1, 1]} : vector<32x32xbf16> to vector<8x32xbf16>
    %cst_73 = arith.constant dense<0.000000e+00> : vector<16x32xf32>
    %264 = tpu.matmul %262, %263, %cst_73 {dimension_numbers = #tpu.dot_dimension_numbers<[1], [0], [0], [1], [0, 0, 1, 1], [], []>} : vector<16x8xbf16>, vector<8x32xbf16>, vector<16x32xf32> -> vector<16x32xf32>
    %265 = arith.addf %244, %264 : vector<16x32xf32>
    %266 = vector.extract_strided_slice %195 {offsets = [0, 24], sizes = [16, 8], strides = [1, 1]} : vector<16x32xbf16> to vector<16x8xbf16>
    %267 = vector.extract_strided_slice %198 {offsets = [24, 0], sizes = [8, 16], strides = [1, 1]} : vector<32x16xbf16> to vector<8x16xbf16>
    %cst_74 = arith.constant dense<0.000000e+00> : vector<16x16xf32>
    %268 = tpu.matmul %266, %267, %cst_74 {dimension_numbers = #tpu.dot_dimension_numbers<[1], [0], [0], [1], [0, 0, 1, 1], [], []>} : vector<16x8xbf16>, vector<8x16xbf16>, vector<16x16xf32> -> vector<16x16xf32>
    %269 = arith.addf %268, %12 : vector<16x16xf32>
    %cst_75 = arith.constant dense<0xFF800000> : vector<16xf32>
    %270 = vector.multi_reduction <maximumf>, %269, %cst_75 [1] : vector<16x16xf32> to vector<16xf32>
    %271 = vector.shape_cast %270 : vector<16xf32> to vector<16x1xf32>
    %272 = vector.broadcast %271 : vector<16x1xf32> to vector<16x16xf32>
    %273 = arith.subf %269, %272 : vector<16x16xf32>
    %274 = math.exp %273 : vector<16x16xf32>
    %cst_76 = arith.constant dense<0.000000e+00> : vector<16xf32>
    %275 = vector.multi_reduction <add>, %274, %cst_76 [1] : vector<16x16xf32> to vector<16xf32>
    %276 = vector.shape_cast %275 : vector<16xf32> to vector<16x1xf32>
    %277 = tpu.reciprocal %276 {approx = true} : vector<16x1xf32> -> vector<16x1xf32>
    %278 = vector.broadcast %277 : vector<16x1xf32> to vector<16x16xf32>
    %279 = arith.mulf %274, %278 : vector<16x16xf32>
    %280 = arith.truncf %279 : vector<16x16xf32> to vector<16x16xbf16>
    %281 = vector.extract_strided_slice %200 {offsets = [0, 24], sizes = [16, 8], strides = [1, 1]} : vector<16x32xbf16> to vector<16x8xbf16>
    %cst_77 = arith.constant dense<0.000000e+00> : vector<16x8xf32>
    %282 = tpu.matmul %280, %281, %cst_77 {dimension_numbers = #tpu.dot_dimension_numbers<[1], [0], [0], [1], [0, 0, 1, 1], [], []>} : vector<16x16xbf16>, vector<16x8xbf16>, vector<16x8xf32> -> vector<16x8xf32>
    %283 = arith.truncf %282 : vector<16x8xf32> to vector<16x8xbf16>
    %284 = vector.extract_strided_slice %201 {offsets = [24, 0], sizes = [8, 32], strides = [1, 1]} : vector<32x32xbf16> to vector<8x32xbf16>
    %cst_78 = arith.constant dense<0.000000e+00> : vector<16x32xf32>
    %285 = tpu.matmul %283, %284, %cst_78 {dimension_numbers = #tpu.dot_dimension_numbers<[1], [0], [0], [1], [0, 0, 1, 1], [], []>} : vector<16x8xbf16>, vector<8x32xbf16>, vector<16x32xf32> -> vector<16x32xf32>
    %286 = arith.addf %265, %285 : vector<16x32xf32>
    %c361 = arith.constant 361 : index
    %c0_79 = arith.constant 0 : index
    %287 = vector.load %arg1[%c361, %c0_79] : memref<400x128xbf16, #tpu.memory_space<vmem>>, vector<1x32xbf16>
    %288 = arith.extf %287 : vector<1x32xbf16> to vector<1x32xf32>
    %289 = vector.broadcast %288 : vector<1x32xf32> to vector<16x32xf32>
    %290 = arith.addf %286, %289 : vector<16x32xf32>
    %291 = arith.addf %186, %290 : vector<16x32xf32>
    %c362 = arith.constant 362 : index
    %c0_80 = arith.constant 0 : index
    %292 = vector.load %arg1[%c362, %c0_80] : memref<400x128xbf16, #tpu.memory_space<vmem>>, vector<1x32xbf16>
    %293 = arith.extf %292 : vector<1x32xbf16> to vector<1x32xf32>
    %c363 = arith.constant 363 : index
    %c0_81 = arith.constant 0 : index
    %294 = vector.load %arg1[%c363, %c0_81] : memref<400x128xbf16, #tpu.memory_space<vmem>>, vector<1x32xbf16>
    %295 = arith.extf %294 : vector<1x32xbf16> to vector<1x32xf32>
    %cst_82 = arith.constant dense<0.000000e+00> : vector<16xf32>
    %296 = vector.multi_reduction <add>, %291, %cst_82 [1] : vector<16x32xf32> to vector<16xf32>
    %297 = vector.shape_cast %296 : vector<16xf32> to vector<16x1xf32>
    %cst_83 = arith.constant 3.200000e+01 : f32
    %298 = vector.broadcast %cst_83 : f32 to vector<16x1xf32>
    %299 = arith.divf %297, %298 : vector<16x1xf32>
    %300 = vector.broadcast %299 : vector<16x1xf32> to vector<16x32xf32>
    %301 = arith.subf %291, %300 : vector<16x32xf32>
    %302 = arith.mulf %301, %301 : vector<16x32xf32>
    %cst_84 = arith.constant dense<0.000000e+00> : vector<16xf32>
    %303 = vector.multi_reduction <add>, %302, %cst_84 [1] : vector<16x32xf32> to vector<16xf32>
    %304 = vector.shape_cast %303 : vector<16xf32> to vector<16x1xf32>
    %cst_85 = arith.constant 3.200000e+01 : f32
    %305 = vector.broadcast %cst_85 : f32 to vector<16x1xf32>
    %306 = arith.divf %304, %305 : vector<16x1xf32>
    %307 = vector.broadcast %299 : vector<16x1xf32> to vector<16x32xf32>
    %308 = arith.subf %291, %307 : vector<16x32xf32>
    %cst_86 = arith.constant 9.99999974E-6 : f32
    %309 = vector.broadcast %cst_86 : f32 to vector<16x1xf32>
    %310 = arith.addf %306, %309 : vector<16x1xf32>
    %311 = math.rsqrt %310 : vector<16x1xf32>
    %312 = vector.broadcast %311 : vector<16x1xf32> to vector<16x32xf32>
    %313 = arith.mulf %308, %312 : vector<16x32xf32>
    %314 = vector.broadcast %293 : vector<1x32xf32> to vector<16x32xf32>
    %315 = arith.mulf %313, %314 : vector<16x32xf32>
    %316 = vector.broadcast %295 : vector<1x32xf32> to vector<16x32xf32>
    %317 = arith.addf %315, %316 : vector<16x32xf32>
    %c264 = arith.constant 264 : index
    %c0_87 = arith.constant 0 : index
    %318 = vector.load %arg1[%c264, %c0_87] : memref<400x128xbf16, #tpu.memory_space<vmem>>, vector<32x64xbf16>
    %319 = arith.truncf %317 : vector<16x32xf32> to vector<16x32xbf16>
    %cst_88 = arith.constant dense<0.000000e+00> : vector<16x64xf32>
    %320 = tpu.matmul %319, %318, %cst_88 {dimension_numbers = #tpu.dot_dimension_numbers<[1], [0], [0], [1], [0, 0, 1, 1], [], []>} : vector<16x32xbf16>, vector<32x64xbf16>, vector<16x64xf32> -> vector<16x64xf32>
    %c364 = arith.constant 364 : index
    %c0_89 = arith.constant 0 : index
    %321 = vector.load %arg1[%c364, %c0_89] : memref<400x128xbf16, #tpu.memory_space<vmem>>, vector<1x64xbf16>
    %322 = arith.extf %321 : vector<1x64xbf16> to vector<1x64xf32>
    %323 = vector.broadcast %322 : vector<1x64xf32> to vector<16x64xf32>
    %324 = arith.addf %320, %323 : vector<16x64xf32>
    %cst_90 = arith.constant 0.000000e+00 : f32
    %325 = vector.broadcast %cst_90 : f32 to vector<16x64xf32>
    %326 = arith.maximumf %324, %325 : vector<16x64xf32>
    %c296 = arith.constant 296 : index
    %c0_91 = arith.constant 0 : index
    %327 = vector.load %arg1[%c296, %c0_91] : memref<400x128xbf16, #tpu.memory_space<vmem>>, vector<64x32xbf16>
    %328 = arith.truncf %326 : vector<16x64xf32> to vector<16x64xbf16>
    %cst_92 = arith.constant dense<0.000000e+00> : vector<16x32xf32>
    %329 = tpu.matmul %328, %327, %cst_92 {dimension_numbers = #tpu.dot_dimension_numbers<[1], [0], [0], [1], [0, 0, 1, 1], [], []>} : vector<16x64xbf16>, vector<64x32xbf16>, vector<16x32xf32> -> vector<16x32xf32>
    %c365 = arith.constant 365 : index
    %c0_93 = arith.constant 0 : index
    %330 = vector.load %arg1[%c365, %c0_93] : memref<400x128xbf16, #tpu.memory_space<vmem>>, vector<1x32xbf16>
    %331 = arith.extf %330 : vector<1x32xbf16> to vector<1x32xf32>
    %332 = vector.broadcast %331 : vector<1x32xf32> to vector<16x32xf32>
    %333 = arith.addf %329, %332 : vector<16x32xf32>
    %334 = arith.addf %317, %333 : vector<16x32xf32>
    %c366 = arith.constant 366 : index
    %c0_94 = arith.constant 0 : index
    %335 = vector.load %arg1[%c366, %c0_94] : memref<400x128xbf16, #tpu.memory_space<vmem>>, vector<1x32xbf16>
    %336 = arith.extf %335 : vector<1x32xbf16> to vector<1x32xf32>
    %c367 = arith.constant 367 : index
    %c0_95 = arith.constant 0 : index
    %337 = vector.load %arg1[%c367, %c0_95] : memref<400x128xbf16, #tpu.memory_space<vmem>>, vector<1x32xbf16>
    %338 = arith.extf %337 : vector<1x32xbf16> to vector<1x32xf32>
    %cst_96 = arith.constant dense<0.000000e+00> : vector<16xf32>
    %339 = vector.multi_reduction <add>, %334, %cst_96 [1] : vector<16x32xf32> to vector<16xf32>
    %340 = vector.shape_cast %339 : vector<16xf32> to vector<16x1xf32>
    %cst_97 = arith.constant 3.200000e+01 : f32
    %341 = vector.broadcast %cst_97 : f32 to vector<16x1xf32>
    %342 = arith.divf %340, %341 : vector<16x1xf32>
    %343 = vector.broadcast %342 : vector<16x1xf32> to vector<16x32xf32>
    %344 = arith.subf %334, %343 : vector<16x32xf32>
    %345 = arith.mulf %344, %344 : vector<16x32xf32>
    %cst_98 = arith.constant dense<0.000000e+00> : vector<16xf32>
    %346 = vector.multi_reduction <add>, %345, %cst_98 [1] : vector<16x32xf32> to vector<16xf32>
    %347 = vector.shape_cast %346 : vector<16xf32> to vector<16x1xf32>
    %cst_99 = arith.constant 3.200000e+01 : f32
    %348 = vector.broadcast %cst_99 : f32 to vector<16x1xf32>
    %349 = arith.divf %347, %348 : vector<16x1xf32>
    %350 = vector.broadcast %342 : vector<16x1xf32> to vector<16x32xf32>
    %351 = arith.subf %334, %350 : vector<16x32xf32>
    %cst_100 = arith.constant 9.99999974E-6 : f32
    %352 = vector.broadcast %cst_100 : f32 to vector<16x1xf32>
    %353 = arith.addf %349, %352 : vector<16x1xf32>
    %354 = math.rsqrt %353 : vector<16x1xf32>
    %355 = vector.broadcast %354 : vector<16x1xf32> to vector<16x32xf32>
    %356 = arith.mulf %351, %355 : vector<16x32xf32>
    %357 = vector.broadcast %336 : vector<1x32xf32> to vector<16x32xf32>
    %358 = arith.mulf %356, %357 : vector<16x32xf32>
    %359 = vector.broadcast %338 : vector<1x32xf32> to vector<16x32xf32>
    %360 = arith.addf %358, %359 : vector<16x32xf32>
    %361 = vector.extract_strided_slice %360 {offsets = [4, 0], sizes = [4, 32], strides = [1, 1]} : vector<16x32xf32> to vector<4x32xf32>
    %362 = vector.extract_strided_slice %360 {offsets = [12, 0], sizes = [4, 32], strides = [1, 1]} : vector<16x32xf32> to vector<4x32xf32>
    %363 = tpu.concatenate %361, %362 in 0 : vector<4x32xf32>, vector<4x32xf32> -> vector<8x32xf32>
    %c368 = arith.constant 368 : index
    %c0_101 = arith.constant 0 : index
    %364 = vector.load %arg1[%c368, %c0_101] : memref<400x128xbf16, #tpu.memory_space<vmem>>, vector<32x4xbf16>
    %365 = arith.truncf %363 : vector<8x32xf32> to vector<8x32xbf16>
    %cst_102 = arith.constant dense<0.000000e+00> : vector<8x4xf32>
    %366 = tpu.matmul %365, %364, %cst_102 {dimension_numbers = #tpu.dot_dimension_numbers<[1], [0], [0], [1], [0, 0, 1, 1], [], []>} : vector<8x32xbf16>, vector<32x4xbf16>, vector<8x4xf32> -> vector<8x4xf32>
    %c25 = arith.constant 25 : index
    %c0_103 = arith.constant 0 : index
    %367 = vector.load %arg1[%c25, %c0_103] : memref<400x128xbf16, #tpu.memory_space<vmem>>, vector<1x4xbf16>
    %368 = arith.extf %367 : vector<1x4xbf16> to vector<1x4xf32>
    %369 = vector.broadcast %368 : vector<1x4xf32> to vector<8x4xf32>
    %370 = arith.addf %366, %369 : vector<8x4xf32>
    %c0_104 = arith.constant 0 : index
    %c0_105 = arith.constant 0 : index
    %371 = vector.load %arg2[%c0_104, %c0_105] : memref<8x4xf32, #tpu.memory_space<vmem>>, vector<8x4xf32>
    tpu.vector_store %arg2[%c0_104, %c0_105], %370 {strides = array<i32>} : memref<8x4xf32, #tpu.memory_space<vmem>>, vector<8x4xf32>,
    return
  }
}

</mosaic_0001>

<llo_original>
// kernel: tpu_custom_call.1
$region0: #{tpu_custom_call.1}
  #allocation0 [shape = 'u32[]', space=smem, size = 0x4, offset = 0x4, fixed_abs, tag = 'smem constant byte address 0x4 - core index']
  #allocation1 [shape = 'u32[144,128]{1,0:T(1,128)}', space=vmem, size = 0x12000, scoped, tag = 'internal scratch']
  %s0 = inlined_call_operand.vmem [shape: f32[16,4], index: 0, kind: input, shape index: {}]
  %s1 = inlined_call_operand.hbm [shape: bf16[400,128], index: 1, kind: input, shape index: {}]
  %s2 = inlined_call_operand.vmem [shape: f32[8,4], index: 2, kind: output, shape index: {}]
  %s3 = sld [smem:[#allocation0]]
  $region22: #{tpu_custom_call.1} parent=0
    _
  %s5 = ssub.s32 1, %s3
  %s6 = scalar_select 0, %s5, %s3
  $region1: #{tpu_custom_call.1} parent=0
    #allocation2 [shape = 'u8[102400]{0}', space=vmem, size = 0x19000, scoped, tag = 'input window, operand 1, single buffered']
    #allocation3 [shape = 's32[1]{0}', space=sflag, size = 0x4, scoped, tag = 'scoped memory for tpu_custom_call.1']
    %7 = vsyncpa [#allocation3], 0
    // Predicated region
    $region2: #{tpu_custom_call.1} parent=1 // pred_check
      _
    $region3: #{tpu_custom_call.1} parent=1 // pred_check_branch
      %9 = sbr.rel (0) target = $region5
    $region4: #{tpu_custom_call.1} parent=1 // pred_region
      _
    $region5: #{tpu_custom_call.1} parent=1 // pred_fallthru
      _
    // Predicated region
    $region6: #{tpu_custom_call.1} parent=1 // pred_check
      _
    $region7: #{tpu_custom_call.1} parent=1 // pred_check_branch
      %11 = sbr.rel (0) target = $region9
    $region8: #{tpu_custom_call.1} parent=1 // pred_region
      %s13 = ssub.s32 3200, 3200
      %14 = vsyncadd [#allocation3], %s13
      %s15 = sshll.u32 [#allocation2], 4
      %s16 = int_to_ptr.vmem [resolvable:$true] %s15
      %21 = dma.hbm_to_vmem [thread:$0]  %s1, 3200, %s16, [#allocation3], 64, 64, 4
    $region9: #{tpu_custom_call.1} parent=1 // pred_fallthru
      _
    // Predicated region
    $region10: #{tpu_custom_call.1} parent=1 // pred_check
      _
    $region11: #{tpu_custom_call.1} parent=1 // pred_check_branch
      %23 = sbr.rel (0) target = $region13
    $region12: #{tpu_custom_call.1} parent=1 // pred_region
      %24 = dma.done [#allocation3], 3200
    $region13: #{tpu_custom_call.1} parent=1 // pred_fallthru
      _
    %v26 = vld [vmem:[#allocation2] sm:$0x3]
    %v27 = vld [vmem:[%s0] sm:$0xff]
    %v28 = vld [vmem:[%s0 + $0x8] sm:$0xff]
    %v29 = vpack.c.bf16 %v28, %v27
    %v30 = vld [vmem:[#allocation2 + $0xc] sm:$0x1]
    %v31 = vunpack.c.l.bf16 %v30
    %v32 = vlaneseq
    %v33 = vshrl.u32 %v32, 7
    %v34 = vsub.s32 0, %v33
    %v35 = vrot.slane %v31, %v34
    %vm36 = vcmask 31744
    %v38 = vsel %vm36, %v29, 0
    %vm40 = vcmask 1041408
    %v42 = vsel %vm40, %v26, 0
    %44 = vmatprep.subr.bf16.mxu0 0
    %45 = vmatpush1.bf16.msra.mxu0 0
    %46 = vmatprep.subr.bf16.mxu0 0
    %47 = vmatpush1.bf16.msra.mxu0 0
    %48 = vmatprep.subr.bf16.mxu0 0
    %49 = vmatpush1.bf16.msra.mxu0 0
    %50 = vmatprep.subr.bf16.mxu0 0
    %51 = vmatpush1.bf16.msra.mxu0 0
    %52 = vmatprep.subr.bf16.mxu0 0
    %53 = vmatpush1.bf16.msra.mxu0 0
    %54 = vmatprep.subr.bf16.mxu0 0
    %55 = vmatpush1.bf16.msra.mxu0 0
    %56 = vmatprep.subr.bf16.mxu0 0
    %57 = vmatpush1.bf16.msra.mxu0 0
    %58 = vmatprep.subr.bf16.mxu0 0
    %59 = vmatpush1.bf16.msra.mxu0 %v42
    %60 = vmatprep.subr.bf16.mxu0 0
    %61 = vmatpush2.bf16.msra.mxu0 0
    %62 = vmatprep.subr.bf16.mxu0 0
    %63 = vmatpush2.bf16.msra.mxu0 0
    %64 = vmatprep.subr.bf16.mxu0 0
    %65 = vmatpush2.bf16.msra.mxu0 0
    %66 = vmatprep.subr.bf16.mxu0 0
    %67 = vmatpush2.bf16.msra.mxu0 0
    %68 = vmatprep.subr.bf16.mxu0 0
    %69 = vmatpush2.bf16.msra.mxu0 0
    %70 = vmatprep.subr.bf16.mxu0 0
    %71 = vmatpush2.bf16.msra.mxu0 0
    %72 = vmatprep.subr.bf16.mxu0 0
    %73 = vmatpush2.bf16.msra.mxu0 0
    %74 = vmatprep.subr.bf16.mxu0 0
    %75 = vmatpush2.bf16.msra.mxu0 0
    %76 = vmatprep.mubr.bf16.mxu0 0
    %77 = vmatmul.mubr.bf16.gmra.mxu0 %v38
    %v78 = vpop.f32.mrf.mxu0
    %v79 = vadd.f32 %v35, %v78
    %v80 = vpop.f32.mrf.mxu0
    %v81 = vpop.f32.mrf.mxu0
    %v82 = vadd.f32 %v35, %v81
    %v83 = vpop.f32.mrf.mxu0
    %84 = vdwg.mxu0
    %v85 = vld [vmem:[#allocation2 + $0x4] sm:$0xf]
    %v86 = vld [vmem:[#allocation2 + $0x8] sm:$0xf]
    %v87 = vunpack.c.l.bf16 %v85
    %v88 = vunpack.c.l.bf16 %v86
    %v89 = vadd.f32 %v79, %v87
    %v90 = vadd.f32 %v82, %v88
    %v91 = vld [vmem:[#allocation2 + $0x10] sm:$0xf]
    %v92 = vld [vmem:[#allocation2 + $0x14] sm:$0xf]
    %v93 = vld [vmem:[#allocation2 + $0x18] sm:$0xf]
    %v94 = vld [vmem:[#allocation2 + $0x1c] sm:$0xf]
    %v95 = vpack.c.bf16 %v90, %v89
    %v96 = vld [vmem:[#allocation2 + $0x60] sm:$0x1]
    %v97 = vunpack.c.l.bf16 %v96
    %v98 = vlaneseq
    %v99 = vshrl.u32 %v98, 7
    %v100 = vsub.s32 0, %v99
    %v101 = vrot.slane %v97, %v100
    %v106 = vunpack.c.l.b16 %v91
    %v107 = vunpack.c.l.b16 %v92
    %v108 = vunpack.c.l.b16 %v93
    %v109 = vunpack.c.l.b16 %v94
    %v110 = vpack.c.b16 %v107, %v106
    %v111 = vpack.c.b16 %v109, %v108
    %vm114 = vcmask 261120
    %v116 = vsel %vm114, %v95, 0
    %118 = vmatprep.subr.bf16.mxu0 0
    %119 = vmatpush1.bf16.msra.mxu0 0
    %120 = vmatprep.subr.bf16.mxu0 0
    %121 = vmatpush1.bf16.msra.mxu0 0
    %122 = vmatprep.subr.bf16.mxu0 0
    %123 = vmatpush1.bf16.msra.mxu0 0
    %124 = vmatprep.subr.bf16.mxu0 0
    %125 = vmatpush1.bf16.msra.mxu0 0
    %126 = vmatprep.subr.bf16.mxu0 0
    %127 = vmatpush1.bf16.msra.mxu0 0
    %128 = vmatprep.subr.bf16.mxu0 0
    %129 = vmatpush1.bf16.msra.mxu0 0
    %130 = vmatprep.subr.bf16.mxu0 0
    %131 = vmatpush1.bf16.msra.mxu0 %v111
    %132 = vmatprep.subr.bf16.mxu0 0
    %133 = vmatpush1.bf16.msra.mxu0 %v110
    %134 = vmatprep.subr.bf16.mxu0 0
    %135 = vmatpush2.bf16.msra.mxu0 0
    %136 = vmatprep.subr.bf16.mxu0 0
    %137 = vmatpush2.bf16.msra.mxu0 0
    %138 = vmatprep.subr.bf16.mxu0 0
    %139 = vmatpush2.bf16.msra.mxu0 0
    %140 = vmatprep.subr.bf16.mxu0 0
    %141 = vmatpush2.bf16.msra.mxu0 0
    %142 = vmatprep.subr.bf16.mxu0 0
    %143 = vmatpush2.bf16.msra.mxu0 0
    %144 = vmatprep.subr.bf16.mxu0 0
    %145 = vmatpush2.bf16.msra.mxu0 0
    %146 = vmatprep.subr.bf16.mxu0 0
    %147 = vmatpush2.bf16.msra.mxu0 0
    %148 = vmatprep.subr.bf16.mxu0 0
    %149 = vmatpush2.bf16.msra.mxu0 0
    %150 = vmatprep.mubr.bf16.mxu0 0
    %151 = vmatmul.mubr.bf16.gmra.mxu0 %v116
    %v152 = vpop.f32.mrf.mxu0
    %v153 = vadd.f32 %v101, %v152
    %v154 = vpop.f32.mrf.mxu0
    %v155 = vpop.f32.mrf.mxu0
    %v156 = vadd.f32 %v101, %v155
    %v157 = vpop.f32.mrf.mxu0
    %158 = vdwg.mxu0
    %v159 = vpack.c.bf16 %v156, %v153
    %162 = vrot.lane.b32.xlu0 %v153, 96
    %v163 = vpop.permute.xlu0 %162
    %164 = vrot.lane.b32.xlu0 %v156, 96
    %v165 = vpop.permute.xlu0 %164
    %168 = vxpose.xlu0.b32.start [1/16] %v163, 128
    %169 = vxpose.xlu0.b32.cont [2/16] %v165, 128
    %170 = vxpose.xlu0.b32.cont [3/16] 0.0, 128
    %171 = vxpose.xlu0.b32.cont [4/16] 0.0, 128
    %172 = vxpose.xlu0.b32.cont [5/16] 0.0, 128
    %173 = vxpose.xlu0.b32.cont [6/16] 0.0, 128
    %174 = vxpose.xlu0.b32.cont [7/16] 0.0, 128
    %175 = vxpose.xlu0.b32.cont [8/16] 0.0, 128
    %176 = vxpose.xlu0.b32.cont [9/16] 0.0, 128
    %177 = vxpose.xlu0.b32.cont [10/16] 0.0, 128
    %178 = vxpose.xlu0.b32.cont [11/16] 0.0, 128
    %179 = vxpose.xlu0.b32.cont [12/16] 0.0, 128
    %180 = vxpose.xlu0.b32.cont [13/16] 0.0, 128
    %181 = vxpose.xlu0.b32.cont [14/16] 0.0, 128
    %182 = vxpose.xlu0.b32.cont [15/16] 0.0, 128
    %183 = vxpose.xlu0.b32.end [16/16] 0.0, 128
    %v184 = vpop.trf.xlu0
    %v185 = vpop.trf.xlu0
    %v186 = vpop.trf.xlu0
    %v187 = vpop.trf.xlu0
    %v188 = vpop.trf.xlu0
    %v189 = vpop.trf.xlu0
    %v190 = vpop.trf.xlu0
    %v191 = vpop.trf.xlu0
    %v192 = vpop.trf.xlu0
    %v193 = vpop.trf.xlu0
    %v194 = vpop.trf.xlu0
    %v195 = vpop.trf.xlu0
    %v196 = vpop.trf.xlu0
    %v197 = vpop.trf.xlu0
    %v198 = vpop.trf.xlu0
    %v199 = vpop.trf.xlu0
    %v200 = vpack.c.bf16 %v185, %v184
    %v201 = vpack.c.bf16 %v187, %v186
    %v202 = vld [vmem:[#allocation2 + $0x20] sm:$0xf]
    %v203 = vld [vmem:[#allocation2 + $0x24] sm:$0xf]
    %v204 = vld [vmem:[#allocation2 + $0x28] sm:$0xf]
    %v205 = vld [vmem:[#allocation2 + $0x2c] sm:$0xf]
    %208 = vrot.lane.b32.xlu0 %v87, 96
    %v209 = vpop.permute.xlu0 %208
    %210 = vrot.lane.b32.xlu0 %v88, 96
    %v211 = vpop.permute.xlu0 %210
    %vm214 = vcmask 64512
    %v216 = vsel %vm214, %v159, 0
    %vm218 = vcmask 1043456
    %v220 = vsel %vm218, %v200, 0
    %222 = vmatprep.subr.bf16.mxu0 0
    %223 = vmatpush1.bf16.msra.mxu0 0
    %224 = vmatprep.subr.bf16.mxu0 0
    %225 = vmatpush1.bf16.msra.mxu0 0
    %226 = vmatprep.subr.bf16.mxu0 0
    %227 = vmatpush1.bf16.msra.mxu0 0
    %228 = vmatprep.subr.bf16.mxu0 0
    %229 = vmatpush1.bf16.msra.mxu0 0
    %230 = vmatprep.subr.bf16.mxu0 0
    %231 = vmatpush1.bf16.msra.mxu0 0
    %232 = vmatprep.subr.bf16.mxu0 0
    %233 = vmatpush1.bf16.msra.mxu0 0
    %234 = vmatprep.subr.bf16.mxu0 0
    %235 = vmatpush1.bf16.msra.mxu0 0
    %236 = vmatprep.subr.bf16.mxu0 0
    %237 = vmatpush1.bf16.msra.mxu0 %v220
    %238 = vmatprep.subr.bf16.mxu0 0
    %239 = vmatpush2.bf16.msra.mxu0 0
    %240 = vmatprep.subr.bf16.mxu0 0
    %241 = vmatpush2.bf16.msra.mxu0 0
    %242 = vmatprep.subr.bf16.mxu0 0
    %243 = vmatpush2.bf16.msra.mxu0 0
    %244 = vmatprep.subr.bf16.mxu0 0
    %245 = vmatpush2.bf16.msra.mxu0 0
    %246 = vmatprep.subr.bf16.mxu0 0
    %247 = vmatpush2.bf16.msra.mxu0 0
    %248 = vmatprep.subr.bf16.mxu0 0
    %249 = vmatpush2.bf16.msra.mxu0 0
    %250 = vmatprep.subr.bf16.mxu0 0
    %251 = vmatpush2.bf16.msra.mxu0 0
    %252 = vmatprep.subr.bf16.mxu0 0
    %253 = vmatpush2.bf16.msra.mxu0 0
    %254 = vmatprep.mubr.bf16.mxu0 0
    %255 = vmatmul.mubr.bf16.gmra.mxu0 %v216
    %v256 = vpop.f32.mrf.mxu0
    %v257 = vadd.f32 %v209, %v256
    %v258 = vpop.f32.mrf.mxu0
    %v259 = vpop.f32.mrf.mxu0
    %v260 = vadd.f32 %v211, %v259
    %v261 = vpop.f32.mrf.mxu0
    %262 = vdwg.mxu0
    %vm263 = vcmask 130048
    %v264 = vsel %vm263, %v257, -inf
    %265 = vmax.xlane.f32.xlu0 %v264
    %v266 = vpop.xlane.xlu0 %265
    %v267 = vsel %vm263, %v260, -inf
    %268 = vmax.xlane.f32.xlu0 %v267
    %v269 = vpop.xlane.xlu0 %268
    %v270 = vsub.f32 %v257, %v266
    %v271 = vsub.f32 %v260, %v269
    %v272 = vmul.f32 %v270, 1.442695
    %v273 = vpow.pop %v272
    %v274 = vmul.f32 %v271, 1.442695
    %v275 = vpow.pop %v274
    %v276 = vsel %vm263, %v273, 0.0
    %277 = vadd.xlane.f32.xlu0 %v276
    %v278 = vpop.xlane.xlu0 %277
    %v279 = vsel %vm263, %v275, 0.0
    %280 = vadd.xlane.f32.xlu0 %v279
    %v281 = vpop.xlane.xlu0 %280
    %v282 = vrcp.pop %v278
    %v283 = vrcp.pop %v281
    %v284 = vmul.f32 %v273, %v282
    %v285 = vmul.f32 %v275, %v283
    %v286 = vpack.c.bf16 %v285, %v284
    %288 = vrot.lane.b32.xlu0 %v159, 64
    %v289 = vpop.permute.xlu0 %288
    %v292 = vsel %vm263, %v286, 0
    %294 = vmatprep.subr.bf16.mxu0 0
    %295 = vmatpush1.bf16.msra.mxu0 0
    %296 = vmatprep.subr.bf16.mxu0 0
    %297 = vmatpush1.bf16.msra.mxu0 0
    %298 = vmatprep.subr.bf16.mxu0 0
    %299 = vmatpush1.bf16.msra.mxu0 0
    %300 = vmatprep.subr.bf16.mxu0 0
    %301 = vmatpush1.bf16.msra.mxu0 0
    %302 = vmatprep.subr.bf16.mxu0 0
    %303 = vmatpush1.bf16.msra.mxu0 0
    %304 = vmatprep.subr.bf16.mxu0 0
    %305 = vmatpush1.bf16.msra.mxu0 0
    %306 = vmatprep.subr.bf16.mxu0 0
    %307 = vmatpush1.bf16.msra.mxu0 0
    %308 = vmatprep.subr.bf16.mxu0 0
    %309 = vmatpush1.bf16.msra.mxu0 %v289
    %310 = vmatprep.subr.bf16.mxu0 0
    %311 = vmatpush2.bf16.msra.mxu0 0
    %312 = vmatprep.subr.bf16.mxu0 0
    %313 = vmatpush2.bf16.msra.mxu0 0
    %314 = vmatprep.subr.bf16.mxu0 0
    %315 = vmatpush2.bf16.msra.mxu0 0
    %316 = vmatprep.subr.bf16.mxu0 0
    %317 = vmatpush2.bf16.msra.mxu0 0
    %318 = vmatprep.subr.bf16.mxu0 0
    %319 = vmatpush2.bf16.msra.mxu0 0
    %320 = vmatprep.subr.bf16.mxu0 0
    %321 = vmatpush2.bf16.msra.mxu0 0
    %322 = vmatprep.subr.bf16.mxu0 0
    %323 = vmatpush2.bf16.msra.mxu0 0
    %324 = vmatprep.subr.bf16.mxu0 0
    %325 = vmatpush2.bf16.msra.mxu0 0
    %326 = vmatprep.mubr.bf16.mxu0 0
    %327 = vmatmul.mubr.bf16.gmra.mxu0 %v292
    %v328 = vpop.f32.mrf.mxu0
    %v329 = vadd.f32 0.0, %v328
    %v330 = vpop.f32.mrf.mxu0
    %v331 = vpop.f32.mrf.mxu0
    %v332 = vadd.f32 0.0, %v331
    %v333 = vpop.f32.mrf.mxu0
    %334 = vdwg.mxu0
    %v335 = vpack.c.bf16 %v332, %v329
    %336 = vrot.lane.b32.xlu0 %v159, 120
    %v337 = vpop.permute.xlu0 %336
    %v339 = vrot.slane %v200, 4
    %v341 = vsel %vm214, %v337, 0
    %v344 = vsel %vm218, %v339, 0
    %346 = vmatprep.subr.bf16.mxu0 0
    %347 = vmatpush1.bf16.msra.mxu0 0
    %348 = vmatprep.subr.bf16.mxu0 0
    %349 = vmatpush1.bf16.msra.mxu0 0
    %350 = vmatprep.subr.bf16.mxu0 0
    %351 = vmatpush1.bf16.msra.mxu0 0
    %352 = vmatprep.subr.bf16.mxu0 0
    %353 = vmatpush1.bf16.msra.mxu0 0
    %354 = vmatprep.subr.bf16.mxu0 0
    %355 = vmatpush1.bf16.msra.mxu0 0
    %356 = vmatprep.subr.bf16.mxu0 0
    %357 = vmatpush1.bf16.msra.mxu0 0
    %358 = vmatprep.subr.bf16.mxu0 0
    %359 = vmatpush1.bf16.msra.mxu0 0
    %360 = vmatprep.subr.bf16.mxu0 0
    %361 = vmatpush1.bf16.msra.mxu0 %v344
    %362 = vmatprep.subr.bf16.mxu0 0
    %363 = vmatpush2.bf16.msra.mxu0 0
    %364 = vmatprep.subr.bf16.mxu0 0
    %365 = vmatpush2.bf16.msra.mxu0 0
    %366 = vmatprep.subr.bf16.mxu0 0
    %367 = vmatpush2.bf16.msra.mxu0 0
    %368 = vmatprep.subr.bf16.mxu0 0
    %369 = vmatpush2.bf16.msra.mxu0 0
    %370 = vmatprep.subr.bf16.mxu0 0
    %371 = vmatpush2.bf16.msra.mxu0 0
    %372 = vmatprep.subr.bf16.mxu0 0
    %373 = vmatpush2.bf16.msra.mxu0 0
    %374 = vmatprep.subr.bf16.mxu0 0
    %375 = vmatpush2.bf16.msra.mxu0 0
    %376 = vmatprep.subr.bf16.mxu0 0
    %377 = vmatpush2.bf16.msra.mxu0 0
    %378 = vmatprep.mubr.bf16.mxu0 0
    %379 = vmatmul.mubr.bf16.gmra.mxu0 %v341
    %v380 = vpop.f32.mrf.mxu0
    %v381 = vadd.f32 %v209, %v380
    %v382 = vpop.f32.mrf.mxu0
    %v383 = vpop.f32.mrf.mxu0
    %v384 = vadd.f32 %v211, %v383
    %v385 = vpop.f32.mrf.mxu0
    %386 = vdwg.mxu0
    %v387 = vsel %vm263, %v381, -inf
    %388 = vmax.xlane.f32.xlu0 %v387
    %v389 = vpop.xlane.xlu0 %388
    %v390 = vsel %vm263, %v384, -inf
    %391 = vmax.xlane.f32.xlu0 %v390
    %v392 = vpop.xlane.xlu0 %391
    %v393 = vsub.f32 %v381, %v389
    %v394 = vsub.f32 %v384, %v392
    %v395 = vmul.f32 %v393, 1.442695
    %v396 = vpow.pop %v395
    %v397 = vmul.f32 %v394, 1.442695
    %v398 = vpow.pop %v397
    %v399 = vsel %vm263, %v396, 0.0
    %400 = vadd.xlane.f32.xlu0 %v399
    %v401 = vpop.xlane.xlu0 %400
    %v402 = vsel %vm263, %v398, 0.0
    %403 = vadd.xlane.f32.xlu0 %v402
    %v404 = vpop.xlane.xlu0 %403
    %v405 = vrcp.pop %v401
    %v406 = vrcp.pop %v404
    %v407 = vmul.f32 %v396, %v405
    %v408 = vmul.f32 %v398, %v406
    %v409 = vpack.c.bf16 %v408, %v407
    %410 = vrot.lane.b32.xlu0 %v159, 56
    %v411 = vpop.permute.xlu0 %410
    %v414 = vsel %vm263, %v409, 0
    %416 = vmatprep.subr.bf16.mxu0 0
    %417 = vmatpush1.bf16.msra.mxu0 0
    %418 = vmatprep.subr.bf16.mxu0 0
    %419 = vmatpush1.bf16.msra.mxu0 0
    %420 = vmatprep.subr.bf16.mxu0 0
    %421 = vmatpush1.bf16.msra.mxu0 0
    %422 = vmatprep.subr.bf16.mxu0 0
    %423 = vmatpush1.bf16.msra.mxu0 0
    %424 = vmatprep.subr.bf16.mxu0 0
    %425 = vmatpush1.bf16.msra.mxu0 0
    %426 = vmatprep.subr.bf16.mxu0 0
    %427 = vmatpush1.bf16.msra.mxu0 0
    %428 = vmatprep.subr.bf16.mxu0 0
    %429 = vmatpush1.bf16.msra.mxu0 0
    %430 = vmatprep.subr.bf16.mxu0 0
    %431 = vmatpush1.bf16.msra.mxu0 %v411
    %432 = vmatprep.subr.bf16.mxu0 0
    %433 = vmatpush2.bf16.msra.mxu0 0
    %434 = vmatprep.subr.bf16.mxu0 0
    %435 = vmatpush2.bf16.msra.mxu0 0
    %436 = vmatprep.subr.bf16.mxu0 0
    %437 = vmatpush2.bf16.msra.mxu0 0
    %438 = vmatprep.subr.bf16.mxu0 0
    %439 = vmatpush2.bf16.msra.mxu0 0
    %440 = vmatprep.subr.bf16.mxu0 0
    %441 = vmatpush2.bf16.msra.mxu0 0
    %442 = vmatprep.subr.bf16.mxu0 0
    %443 = vmatpush2.bf16.msra.mxu0 0
    %444 = vmatprep.subr.bf16.mxu0 0
    %445 = vmatpush2.bf16.msra.mxu0 0
    %446 = vmatprep.subr.bf16.mxu0 0
    %447 = vmatpush2.bf16.msra.mxu0 0
    %448 = vmatprep.mubr.bf16.mxu0 0
    %449 = vmatmul.mubr.bf16.gmra.mxu0 %v414
    %v450 = vpop.f32.mrf.mxu0
    %v451 = vadd.f32 0.0, %v450
    %v452 = vpop.f32.mrf.mxu0
    %v453 = vpop.f32.mrf.mxu0
    %v454 = vadd.f32 0.0, %v453
    %v455 = vpop.f32.mrf.mxu0
    %456 = vdwg.mxu0
    %v457 = vpack.c.bf16 %v454, %v451
    %v459 = vsel %vm214, %v457, 0
    %v462 = vsel %vm218, %v203, 0
    %464 = vmatprep.subr.bf16.mxu0 0
    %465 = vmatpush1.bf16.msra.mxu0 0
    %466 = vmatprep.subr.bf16.mxu0 0
    %467 = vmatpush1.bf16.msra.mxu0 0
    %468 = vmatprep.subr.bf16.mxu0 0
    %469 = vmatpush1.bf16.msra.mxu0 0
    %470 = vmatprep.subr.bf16.mxu0 0
    %471 = vmatpush1.bf16.msra.mxu0 0
    %472 = vmatprep.subr.bf16.mxu0 0
    %473 = vmatpush1.bf16.msra.mxu0 0
    %474 = vmatprep.subr.bf16.mxu0 0
    %475 = vmatpush1.bf16.msra.mxu0 0
    %476 = vmatprep.subr.bf16.mxu0 0
    %477 = vmatpush1.bf16.msra.mxu0 0
    %478 = vmatprep.subr.bf16.mxu0 0
    %479 = vmatpush1.bf16.msra.mxu0 %v462
    %480 = vmatprep.subr.bf16.mxu0 0
    %481 = vmatpush2.bf16.msra.mxu0 0
    %482 = vmatprep.subr.bf16.mxu0 0
    %483 = vmatpush2.bf16.msra.mxu0 0
    %484 = vmatprep.subr.bf16.mxu0 0
    %485 = vmatpush2.bf16.msra.mxu0 0
    %486 = vmatprep.subr.bf16.mxu0 0
    %487 = vmatpush2.bf16.msra.mxu0 0
    %488 = vmatprep.subr.bf16.mxu0 0
    %489 = vmatpush2.bf16.msra.mxu0 0
    %490 = vmatprep.subr.bf16.mxu0 0
    %491 = vmatpush2.bf16.msra.mxu0 0
    %492 = vmatprep.subr.bf16.mxu0 0
    %493 = vmatpush2.bf16.msra.mxu0 0
    %494 = vmatprep.subr.bf16.mxu0 0
    %495 = vmatpush2.bf16.msra.mxu0 0
    %496 = vmatprep.mubr.bf16.mxu0 0
    %497 = vmatmul.mubr.bf16.gmra.mxu0 %v459
    %v498 = vpop.f32.mrf.mxu0
    %v499 = vadd.f32 0.0, %v498
    %v500 = vpop.f32.mrf.mxu0
    %v501 = vpop.f32.mrf.mxu0
    %v502 = vadd.f32 0.0, %v501
    %v503 = vpop.f32.mrf.mxu0
    %504 = vdwg.mxu0
    %v506 = vsel %vm214, %v335, 0
    %v509 = vsel %vm218, %v202, 0
    %511 = vmatprep.subr.bf16.mxu0 0
    %512 = vmatpush1.bf16.msra.mxu0 0
    %513 = vmatprep.subr.bf16.mxu0 0
    %514 = vmatpush1.bf16.msra.mxu0 0
    %515 = vmatprep.subr.bf16.mxu0 0
    %516 = vmatpush1.bf16.msra.mxu0 0
    %517 = vmatprep.subr.bf16.mxu0 0
    %518 = vmatpush1.bf16.msra.mxu0 0
    %519 = vmatprep.subr.bf16.mxu0 0
    %520 = vmatpush1.bf16.msra.mxu0 0
    %521 = vmatprep.subr.bf16.mxu0 0
    %522 = vmatpush1.bf16.msra.mxu0 0
    %523 = vmatprep.subr.bf16.mxu0 0
    %524 = vmatpush1.bf16.msra.mxu0 0
    %525 = vmatprep.subr.bf16.mxu0 0
    %526 = vmatpush1.bf16.msra.mxu0 %v509
    %527 = vmatprep.subr.bf16.mxu0 0
    %528 = vmatpush2.bf16.msra.mxu0 0
    %529 = vmatprep.subr.bf16.mxu0 0
    %530 = vmatpush2.bf16.msra.mxu0 0
    %531 = vmatprep.subr.bf16.mxu0 0
    %532 = vmatpush2.bf16.msra.mxu0 0
    %533 = vmatprep.subr.bf16.mxu0 0
    %534 = vmatpush2.bf16.msra.mxu0 0
    %535 = vmatprep.subr.bf16.mxu0 0
    %536 = vmatpush2.bf16.msra.mxu0 0
    %537 = vmatprep.subr.bf16.mxu0 0
    %538 = vmatpush2.bf16.msra.mxu0 0
    %539 = vmatprep.subr.bf16.mxu0 0
    %540 = vmatpush2.bf16.msra.mxu0 0
    %541 = vmatprep.subr.bf16.mxu0 0
    %542 = vmatpush2.bf16.msra.mxu0 0
    %543 = vmatprep.mubr.bf16.mxu0 0
    %544 = vmatmul.mubr.bf16.gmra.mxu0 %v506
    %v545 = vpop.f32.mrf.mxu0
    %v546 = vadd.f32 %v499, %v545
    %v547 = vpop.f32.mrf.mxu0
    %v548 = vpop.f32.mrf.mxu0
    %v549 = vadd.f32 %v502, %v548
    %v550 = vpop.f32.mrf.mxu0
    %551 = vdwg.mxu0
    %552 = vrot.lane.b32.xlu0 %v159, 112
    %v553 = vpop.permute.xlu0 %552
    %v555 = vsel %vm214, %v553, 0
    %v558 = vsel %vm218, %v201, 0
    %560 = vmatprep.subr.bf16.mxu0 0
    %561 = vmatpush1.bf16.msra.mxu0 0
    %562 = vmatprep.subr.bf16.mxu0 0
    %563 = vmatpush1.bf16.msra.mxu0 0
    %564 = vmatprep.subr.bf16.mxu0 0
    %565 = vmatpush1.bf16.msra.mxu0 0
    %566 = vmatprep.subr.bf16.mxu0 0
    %567 = vmatpush1.bf16.msra.mxu0 0
    %568 = vmatprep.subr.bf16.mxu0 0
    %569 = vmatpush1.bf16.msra.mxu0 0
    %570 = vmatprep.subr.bf16.mxu0 0
    %571 = vmatpush1.bf16.msra.mxu0 0
    %572 = vmatprep.subr.bf16.mxu0 0
    %573 = vmatpush1.bf16.msra.mxu0 0
    %574 = vmatprep.subr.bf16.mxu0 0
    %575 = vmatpush1.bf16.msra.mxu0 %v558
    %576 = vmatprep.subr.bf16.mxu0 0
    %577 = vmatpush2.bf16.msra.mxu0 0
    %578 = vmatprep.subr.bf16.mxu0 0
    %579 = vmatpush2.bf16.msra.mxu0 0
    %580 = vmatprep.subr.bf16.mxu0 0
    %581 = vmatpush2.bf16.msra.mxu0 0
    %582 = vmatprep.subr.bf16.mxu0 0
    %583 = vmatpush2.bf16.msra.mxu0 0
    %584 = vmatprep.subr.bf16.mxu0 0
    %585 = vmatpush2.bf16.msra.mxu0 0
    %586 = vmatprep.subr.bf16.mxu0 0
    %587 = vmatpush2.bf16.msra.mxu0 0
    %588 = vmatprep.subr.bf16.mxu0 0
    %589 = vmatpush2.bf16.msra.mxu0 0
    %590 = vmatprep.subr.bf16.mxu0 0
    %591 = vmatpush2.bf16.msra.mxu0 0
    %592 = vmatprep.mubr.bf16.mxu0 0
    %593 = vmatmul.mubr.bf16.gmra.mxu0 %v555
    %v594 = vpop.f32.mrf.mxu0
    %v595 = vadd.f32 %v209, %v594
    %v596 = vpop.f32.mrf.mxu0
    %v597 = vpop.f32.mrf.mxu0
    %v598 = vadd.f32 %v211, %v597
    %v599 = vpop.f32.mrf.mxu0
    %600 = vdwg.mxu0
    %v601 = vsel %vm263, %v595, -inf
    %602 = vmax.xlane.f32.xlu0 %v601
    %v603 = vpop.xlane.xlu0 %602
    %v604 = vsel %vm263, %v598, -inf
    %605 = vmax.xlane.f32.xlu0 %v604
    %v606 = vpop.xlane.xlu0 %605
    %v607 = vsub.f32 %v595, %v603
    %v608 = vsub.f32 %v598, %v606
    %v609 = vmul.f32 %v607, 1.442695
    %v610 = vpow.pop %v609
    %v611 = vmul.f32 %v608, 1.442695
    %v612 = vpow.pop %v611
    %v613 = vsel %vm263, %v610, 0.0
    %614 = vadd.xlane.f32.xlu0 %v613
    %v615 = vpop.xlane.xlu0 %614
    %v616 = vsel %vm263, %v612, 0.0
    %617 = vadd.xlane.f32.xlu0 %v616
    %v618 = vpop.xlane.xlu0 %617
    %v619 = vrcp.pop %v615
    %v620 = vrcp.pop %v618
    %v621 = vmul.f32 %v610, %v619
    %v622 = vmul.f32 %v612, %v620
    %v623 = vpack.c.bf16 %v622, %v621
    %624 = vrot.lane.b32.xlu0 %v159, 48
    %v625 = vpop.permute.xlu0 %624
    %v628 = vsel %vm263, %v623, 0
    %630 = vmatprep.subr.bf16.mxu0 0
    %631 = vmatpush1.bf16.msra.mxu0 0
    %632 = vmatprep.subr.bf16.mxu0 0
    %633 = vmatpush1.bf16.msra.mxu0 0
    %634 = vmatprep.subr.bf16.mxu0 0
    %635 = vmatpush1.bf16.msra.mxu0 0
    %636 = vmatprep.subr.bf16.mxu0 0
    %637 = vmatpush1.bf16.msra.mxu0 0
    %638 = vmatprep.subr.bf16.mxu0 0
    %639 = vmatpush1.bf16.msra.mxu0 0
    %640 = vmatprep.subr.bf16.mxu0 0
    %641 = vmatpush1.bf16.msra.mxu0 0
    %642 = vmatprep.subr.bf16.mxu0 0
    %643 = vmatpush1.bf16.msra.mxu0 0
    %644 = vmatprep.subr.bf16.mxu0 0
    %645 = vmatpush1.bf16.msra.mxu0 %v625
    %646 = vmatprep.subr.bf16.mxu0 0
    %647 = vmatpush2.bf16.msra.mxu0 0
    %648 = vmatprep.subr.bf16.mxu0 0
    %649 = vmatpush2.bf16.msra.mxu0 0
    %650 = vmatprep.subr.bf16.mxu0 0
    %651 = vmatpush2.bf16.msra.mxu0 0
    %652 = vmatprep.subr.bf16.mxu0 0
    %653 = vmatpush2.bf16.msra.mxu0 0
    %654 = vmatprep.subr.bf16.mxu0 0
    %655 = vmatpush2.bf16.msra.mxu0 0
    %656 = vmatprep.subr.bf16.mxu0 0
    %657 = vmatpush2.bf16.msra.mxu0 0
    %658 = vmatprep.subr.bf16.mxu0 0
    %659 = vmatpush2.bf16.msra.mxu0 0
    %660 = vmatprep.subr.bf16.mxu0 0
    %661 = vmatpush2.bf16.msra.mxu0 0
    %662 = vmatprep.mubr.bf16.mxu0 0
    %663 = vmatmul.mubr.bf16.gmra.mxu0 %v628
    %v664 = vpop.f32.mrf.mxu0
    %v665 = vadd.f32 0.0, %v664
    %v666 = vpop.f32.mrf.mxu0
    %v667 = vpop.f32.mrf.mxu0
    %v668 = vadd.f32 0.0, %v667
    %v669 = vpop.f32.mrf.mxu0
    %670 = vdwg.mxu0
    %v671 = vpack.c.bf16 %v668, %v665
    %v673 = vsel %vm214, %v671, 0
    %v676 = vsel %vm218, %v204, 0
    %678 = vmatprep.subr.bf16.mxu0 0
    %679 = vmatpush1.bf16.msra.mxu0 0
    %680 = vmatprep.subr.bf16.mxu0 0
    %681 = vmatpush1.bf16.msra.mxu0 0
    %682 = vmatprep.subr.bf16.mxu0 0
    %683 = vmatpush1.bf16.msra.mxu0 0
    %684 = vmatprep.subr.bf16.mxu0 0
    %685 = vmatpush1.bf16.msra.mxu0 0
    %686 = vmatprep.subr.bf16.mxu0 0
    %687 = vmatpush1.bf16.msra.mxu0 0
    %688 = vmatprep.subr.bf16.mxu0 0
    %689 = vmatpush1.bf16.msra.mxu0 0
    %690 = vmatprep.subr.bf16.mxu0 0
    %691 = vmatpush1.bf16.msra.mxu0 0
    %692 = vmatprep.subr.bf16.mxu0 0
    %693 = vmatpush1.bf16.msra.mxu0 %v676
    %694 = vmatprep.subr.bf16.mxu0 0
    %695 = vmatpush2.bf16.msra.mxu0 0
    %696 = vmatprep.subr.bf16.mxu0 0
    %697 = vmatpush2.bf16.msra.mxu0 0
    %698 = vmatprep.subr.bf16.mxu0 0
    %699 = vmatpush2.bf16.msra.mxu0 0
    %700 = vmatprep.subr.bf16.mxu0 0
    %701 = vmatpush2.bf16.msra.mxu0 0
    %702 = vmatprep.subr.bf16.mxu0 0
    %703 = vmatpush2.bf16.msra.mxu0 0
    %704 = vmatprep.subr.bf16.mxu0 0
    %705 = vmatpush2.bf16.msra.mxu0 0
    %706 = vmatprep.subr.bf16.mxu0 0
    %707 = vmatpush2.bf16.msra.mxu0 0
    %708 = vmatprep.subr.bf16.mxu0 0
    %709 = vmatpush2.bf16.msra.mxu0 0
    %710 = vmatprep.mubr.bf16.mxu0 0
    %711 = vmatmul.mubr.bf16.gmra.mxu0 %v673
    %v712 = vpop.f32.mrf.mxu0
    %v713 = vadd.f32 0.0, %v712
    %v714 = vpop.f32.mrf.mxu0
    %v715 = vpop.f32.mrf.mxu0
    %v716 = vadd.f32 0.0, %v715
    %v717 = vpop.f32.mrf.mxu0
    %718 = vdwg.mxu0
    %v719 = vadd.f32 %v546, %v713
    %v720 = vadd.f32 %v549, %v716
    %721 = vrot.lane.b32.xlu0 %v159, 104
    %v722 = vpop.permute.xlu0 %721
    %v724 = vrot.slane %v201, 4
    %v726 = vsel %vm214, %v722, 0
    %v729 = vsel %vm218, %v724, 0
    %731 = vmatprep.subr.bf16.mxu0 0
    %732 = vmatpush1.bf16.msra.mxu0 0
    %733 = vmatprep.subr.bf16.mxu0 0
    %734 = vmatpush1.bf16.msra.mxu0 0
    %735 = vmatprep.subr.bf16.mxu0 0
    %736 = vmatpush1.bf16.msra.mxu0 0
    %737 = vmatprep.subr.bf16.mxu0 0
    %738 = vmatpush1.bf16.msra.mxu0 0
    %739 = vmatprep.subr.bf16.mxu0 0
    %740 = vmatpush1.bf16.msra.mxu0 0
    %741 = vmatprep.subr.bf16.mxu0 0
    %742 = vmatpush1.bf16.msra.mxu0 0
    %743 = vmatprep.subr.bf16.mxu0 0
    %744 = vmatpush1.bf16.msra.mxu0 0
    %745 = vmatprep.subr.bf16.mxu0 0
    %746 = vmatpush1.bf16.msra.mxu0 %v729
    %747 = vmatprep.subr.bf16.mxu0 0
    %748 = vmatpush2.bf16.msra.mxu0 0
    %749 = vmatprep.subr.bf16.mxu0 0
    %750 = vmatpush2.bf16.msra.mxu0 0
    %751 = vmatprep.subr.bf16.mxu0 0
    %752 = vmatpush2.bf16.msra.mxu0 0
    %753 = vmatprep.subr.bf16.mxu0 0
    %754 = vmatpush2.bf16.msra.mxu0 0
    %755 = vmatprep.subr.bf16.mxu0 0
    %756 = vmatpush2.bf16.msra.mxu0 0
    %757 = vmatprep.subr.bf16.mxu0 0
    %758 = vmatpush2.bf16.msra.mxu0 0
    %759 = vmatprep.subr.bf16.mxu0 0
    %760 = vmatpush2.bf16.msra.mxu0 0
    %761 = vmatprep.subr.bf16.mxu0 0
    %762 = vmatpush2.bf16.msra.mxu0 0
    %763 = vmatprep.mubr.bf16.mxu0 0
    %764 = vmatmul.mubr.bf16.gmra.mxu0 %v726
    %v765 = vpop.f32.mrf.mxu0
    %v766 = vadd.f32 %v209, %v765
    %v767 = vpop.f32.mrf.mxu0
    %v768 = vpop.f32.mrf.mxu0
    %v769 = vadd.f32 %v211, %v768
    %v770 = vpop.f32.mrf.mxu0
    %771 = vdwg.mxu0
    %v772 = vsel %vm263, %v766, -inf
    %773 = vmax.xlane.f32.xlu0 %v772
    %v774 = vpop.xlane.xlu0 %773
    %v775 = vsel %vm263, %v769, -inf
    %776 = vmax.xlane.f32.xlu0 %v775
    %v777 = vpop.xlane.xlu0 %776
    %v778 = vsub.f32 %v766, %v774
    %v779 = vsub.f32 %v769, %v777
    %v780 = vmul.f32 %v778, 1.442695
    %v781 = vpow.pop %v780
    %v782 = vmul.f32 %v779, 1.442695
    %v783 = vpow.pop %v782
    %v784 = vsel %vm263, %v781, 0.0
    %785 = vadd.xlane.f32.xlu0 %v784
    %v786 = vpop.xlane.xlu0 %785
    %v787 = vsel %vm263, %v783, 0.0
    %788 = vadd.xlane.f32.xlu0 %v787
    %v789 = vpop.xlane.xlu0 %788
    %v790 = vrcp.pop %v786
    %v791 = vrcp.pop %v789
    %v792 = vmul.f32 %v781, %v790
    %v793 = vmul.f32 %v783, %v791
    %v794 = vpack.c.bf16 %v793, %v792
    %795 = vrot.lane.b32.xlu0 %v159, 40
    %v796 = vpop.permute.xlu0 %795
    %v799 = vsel %vm263, %v794, 0
    %801 = vmatprep.subr.bf16.mxu0 0
    %802 = vmatpush1.bf16.msra.mxu0 0
    %803 = vmatprep.subr.bf16.mxu0 0
    %804 = vmatpush1.bf16.msra.mxu0 0
    %805 = vmatprep.subr.bf16.mxu0 0
    %806 = vmatpush1.bf16.msra.mxu0 0
    %807 = vmatprep.subr.bf16.mxu0 0
    %808 = vmatpush1.bf16.msra.mxu0 0
    %809 = vmatprep.subr.bf16.mxu0 0
    %810 = vmatpush1.bf16.msra.mxu0 0
    %811 = vmatprep.subr.bf16.mxu0 0
    %812 = vmatpush1.bf16.msra.mxu0 0
    %813 = vmatprep.subr.bf16.mxu0 0
    %814 = vmatpush1.bf16.msra.mxu0 0
    %815 = vmatprep.subr.bf16.mxu0 0
    %816 = vmatpush1.bf16.msra.mxu0 %v796
    %817 = vmatprep.subr.bf16.mxu0 0
    %818 = vmatpush2.bf16.msra.mxu0 0
    %819 = vmatprep.subr.bf16.mxu0 0
    %820 = vmatpush2.bf16.msra.mxu0 0
    %821 = vmatprep.subr.bf16.mxu0 0
    %822 = vmatpush2.bf16.msra.mxu0 0
    %823 = vmatprep.subr.bf16.mxu0 0
    %824 = vmatpush2.bf16.msra.mxu0 0
    %825 = vmatprep.subr.bf16.mxu0 0
    %826 = vmatpush2.bf16.msra.mxu0 0
    %827 = vmatprep.subr.bf16.mxu0 0
    %828 = vmatpush2.bf16.msra.mxu0 0
    %829 = vmatprep.subr.bf16.mxu0 0
    %830 = vmatpush2.bf16.msra.mxu0 0
    %831 = vmatprep.subr.bf16.mxu0 0
    %832 = vmatpush2.bf16.msra.mxu0 0
    %833 = vmatprep.mubr.bf16.mxu0 0
    %834 = vmatmul.mubr.bf16.gmra.mxu0 %v799
    %v835 = vpop.f32.mrf.mxu0
    %v836 = vadd.f32 0.0, %v835
    %v837 = vpop.f32.mrf.mxu0
    %v838 = vpop.f32.mrf.mxu0
    %v839 = vadd.f32 0.0, %v838
    %v840 = vpop.f32.mrf.mxu0
    %841 = vdwg.mxu0
    %v842 = vpack.c.bf16 %v839, %v836
    %v844 = vsel %vm214, %v842, 0
    %v847 = vsel %vm218, %v205, 0
    %849 = vmatprep.subr.bf16.mxu0 0
    %850 = vmatpush1.bf16.msra.mxu0 0
    %851 = vmatprep.subr.bf16.mxu0 0
    %852 = vmatpush1.bf16.msra.mxu0 0
    %853 = vmatprep.subr.bf16.mxu0 0
    %854 = vmatpush1.bf16.msra.mxu0 0
    %855 = vmatprep.subr.bf16.mxu0 0
    %856 = vmatpush1.bf16.msra.mxu0 0
    %857 = vmatprep.subr.bf16.mxu0 0
    %858 = vmatpush1.bf16.msra.mxu0 0
    %859 = vmatprep.subr.bf16.mxu0 0
    %860 = vmatpush1.bf16.msra.mxu0 0
    %861 = vmatprep.subr.bf16.mxu0 0
    %862 = vmatpush1.bf16.msra.mxu0 0
    %863 = vmatprep.subr.bf16.mxu0 0
    %864 = vmatpush1.bf16.msra.mxu0 %v847
    %865 = vmatprep.subr.bf16.mxu0 0
    %866 = vmatpush2.bf16.msra.mxu0 0
    %867 = vmatprep.subr.bf16.mxu0 0
    %868 = vmatpush2.bf16.msra.mxu0 0
    %869 = vmatprep.subr.bf16.mxu0 0
    %870 = vmatpush2.bf16.msra.mxu0 0
    %871 = vmatprep.subr.bf16.mxu0 0
    %872 = vmatpush2.bf16.msra.mxu0 0
    %873 = vmatprep.subr.bf16.mxu0 0
    %874 = vmatpush2.bf16.msra.mxu0 0
    %875 = vmatprep.subr.bf16.mxu0 0
    %876 = vmatpush2.bf16.msra.mxu0 0
    %877 = vmatprep.subr.bf16.mxu0 0
    %878 = vmatpush2.bf16.msra.mxu0 0
    %879 = vmatprep.subr.bf16.mxu0 0
    %880 = vmatpush2.bf16.msra.mxu0 0
    %881 = vmatprep.mubr.bf16.mxu0 0
    %882 = vmatmul.mubr.bf16.gmra.mxu0 %v844
    %v883 = vpop.f32.mrf.mxu0
    %v884 = vadd.f32 0.0, %v883
    %v885 = vpop.f32.mrf.mxu0
    %v886 = vpop.f32.mrf.mxu0
    %v887 = vadd.f32 0.0, %v886
    %v888 = vpop.f32.mrf.mxu0
    %889 = vdwg.mxu0
    %v890 = vadd.f32 %v719, %v884
    %v891 = vadd.f32 %v720, %v887
    %v892 = vlaneseq
    %v893 = vshrl.u32 %v892, 7
    %v894 = vsub.s32 1, %v893
    %v895 = vrot.slane %v97, %v894
    %v896 = vadd.f32 %v890, %v895
    %v897 = vadd.f32 %v891, %v895
    %v898 = vadd.f32 %v89, %v896
    %v899 = vadd.f32 %v90, %v897
    %v900 = vld [vmem:[#allocation2 + $0x60] sm:$0x2]
    %v901 = vunpack.c.l.bf16 %v900
    %v902 = vsel %vm114, %v898, 0.0
    %903 = vadd.xlane.f32.xlu0 %v902
    %v904 = vpop.xlane.xlu0 %903
    %v905 = vsel %vm114, %v899, 0.0
    %906 = vadd.xlane.f32.xlu0 %v905
    %v907 = vpop.xlane.xlu0 %906
    %v908 = vrcp.pop 32.0
    %v909 = vmul.f32 %v904, %v908
    %v910 = vmul.f32 %v907, %v908
    %v911 = vsub.f32 %v898, %v909
    %v912 = vsub.f32 %v899, %v910
    %v913 = vmul.f32 %v911, %v911
    %v914 = vmul.f32 %v912, %v912
    %v915 = vsel %vm114, %v913, 0.0
    %916 = vadd.xlane.f32.xlu0 %v915
    %v917 = vpop.xlane.xlu0 %916
    %v918 = vsel %vm114, %v914, 0.0
    %919 = vadd.xlane.f32.xlu0 %v918
    %v920 = vpop.xlane.xlu0 %919
    %v921 = vmul.f32 %v917, %v908
    %v922 = vmul.f32 %v920, %v908
    %v923 = vadd.f32 %v921, 1e-05
    %v924 = vadd.f32 %v922, 1e-05
    %v925 = vrsqrt.pop %v923
    %v926 = vrsqrt.pop %v924
    %v927 = vmul.f32 %v911, %v925
    %v928 = vmul.f32 %v912, %v926
    %v929 = vlaneseq
    %v930 = vshrl.u32 %v929, 7
    %v931 = vsub.s32 2, %v930
    %v932 = vrot.slane %v901, %v931
    %v933 = vmul.f32 %v927, %v932
    %v934 = vmul.f32 %v928, %v932
    %v935 = vlaneseq
    %v936 = vshrl.u32 %v935, 7
    %v937 = vsub.s32 3, %v936
    %v938 = vrot.slane %v901, %v937
    %v939 = vadd.f32 %v933, %v938
    %v940 = vadd.f32 %v934, %v938
    %v941 = vld [vmem:[#allocation2 + $0x30] sm:$0xf]
    %v942 = vld [vmem:[#allocation2 + $0x34] sm:$0xf]
    %v943 = vld [vmem:[#allocation2 + $0x38] sm:$0xf]
    %v944 = vld [vmem:[#allocation2 + $0x3c] sm:$0xf]
    %v945 = vpack.c.bf16 %v940, %v939
    %v946 = vld [vmem:[#allocation2 + $0x60] sm:$0x4]
    %v947 = vunpack.c.l.bf16 %v946
    %v948 = vlaneseq
    %v949 = vshrl.u32 %v948, 7
    %v950 = vsub.s32 4, %v949
    %v951 = vrot.slane %v947, %v950
    %v956 = vunpack.c.l.b16 %v941
    %v957 = vunpack.c.l.b16 %v942
    %v958 = vunpack.c.l.b16 %v943
    %v959 = vunpack.c.l.b16 %v944
    %v960 = vpack.c.b16 %v957, %v956
    %v961 = vpack.c.b16 %v959, %v958
    %v965 = vsel %vm114, %v945, 0
    %967 = vmatprep.subr.bf16.mxu0 0
    %968 = vmatpush1.bf16.msra.mxu0 0
    %969 = vmatprep.subr.bf16.mxu0 0
    %970 = vmatpush1.bf16.msra.mxu0 0
    %971 = vmatprep.subr.bf16.mxu0 0
    %972 = vmatpush1.bf16.msra.mxu0 0
    %973 = vmatprep.subr.bf16.mxu0 0
    %974 = vmatpush1.bf16.msra.mxu0 0
    %975 = vmatprep.subr.bf16.mxu0 0
    %976 = vmatpush1.bf16.msra.mxu0 0
    %977 = vmatprep.subr.bf16.mxu0 0
    %978 = vmatpush1.bf16.msra.mxu0 0
    %979 = vmatprep.subr.bf16.mxu0 0
    %980 = vmatpush1.bf16.msra.mxu0 %v961
    %981 = vmatprep.subr.bf16.mxu0 0
    %982 = vmatpush1.bf16.msra.mxu0 %v960
    %983 = vmatprep.subr.bf16.mxu0 0
    %984 = vmatpush2.bf16.msra.mxu0 0
    %985 = vmatprep.subr.bf16.mxu0 0
    %986 = vmatpush2.bf16.msra.mxu0 0
    %987 = vmatprep.subr.bf16.mxu0 0
    %988 = vmatpush2.bf16.msra.mxu0 0
    %989 = vmatprep.subr.bf16.mxu0 0
    %990 = vmatpush2.bf16.msra.mxu0 0
    %991 = vmatprep.subr.bf16.mxu0 0
    %992 = vmatpush2.bf16.msra.mxu0 0
    %993 = vmatprep.subr.bf16.mxu0 0
    %994 = vmatpush2.bf16.msra.mxu0 0
    %995 = vmatprep.subr.bf16.mxu0 0
    %996 = vmatpush2.bf16.msra.mxu0 0
    %997 = vmatprep.subr.bf16.mxu0 0
    %998 = vmatpush2.bf16.msra.mxu0 0
    %999 = vmatprep.mubr.bf16.mxu0 0
    %1000 = vmatmul.mubr.bf16.gmra.mxu0 %v965
    %v1001 = vpop.f32.mrf.mxu0
    %v1002 = vadd.f32 %v951, %v1001
    %v1003 = vpop.f32.mrf.mxu0
    %v1004 = vpop.f32.mrf.mxu0
    %v1005 = vadd.f32 %v951, %v1004
    %v1006 = vpop.f32.mrf.mxu0
    %1007 = vdwg.mxu0
    %v1008 = vmax.f32 %v1002, 0.0
    %v1009 = vmax.f32 %v1005, 0.0
    %v1010 = vld [vmem:[#allocation2 + $0x40] sm:$0xf]
    %v1011 = vld [vmem:[#allocation2 + $0x44] sm:$0xf]
    %v1012 = vld [vmem:[#allocation2 + $0x48] sm:$0xf]
    %v1013 = vld [vmem:[#allocation2 + $0x4c] sm:$0xf]
    %v1014 = vld [vmem:[#allocation2 + $0x50] sm:$0xf]
    %v1015 = vld [vmem:[#allocation2 + $0x54] sm:$0xf]
    %v1016 = vld [vmem:[#allocation2 + $0x58] sm:$0xf]
    %v1017 = vld [vmem:[#allocation2 + $0x5c] sm:$0xf]
    %v1018 = vpack.c.bf16 %v1009, %v1008
    %v1019 = vlaneseq
    %v1020 = vshrl.u32 %v1019, 7
    %v1021 = vsub.s32 5, %v1020
    %v1022 = vrot.slane %v947, %v1021
    %v1031 = vunpack.c.l.b16 %v1010
    %v1032 = vunpack.c.l.b16 %v1011
    %v1033 = vunpack.c.l.b16 %v1012
    %v1034 = vunpack.c.l.b16 %v1013
    %v1035 = vunpack.c.l.b16 %v1014
    %v1036 = vunpack.c.l.b16 %v1015
    %v1037 = vunpack.c.l.b16 %v1016
    %v1038 = vunpack.c.l.b16 %v1017
    %v1039 = vpack.c.b16 %v1032, %v1031
    %v1040 = vpack.c.b16 %v1034, %v1033
    %v1041 = vpack.c.b16 %v1036, %v1035
    %v1042 = vpack.c.b16 %v1038, %v1037
    %vm1047 = vcmask 523264
    %v1049 = vsel %vm1047, %v1018, 0
    %1051 = vmatprep.subr.bf16.mxu0 0
    %1052 = vmatpush1.bf16.msra.mxu0 0
    %1053 = vmatprep.subr.bf16.mxu0 0
    %1054 = vmatpush1.bf16.msra.mxu0 0
    %1055 = vmatprep.subr.bf16.mxu0 0
    %1056 = vmatpush1.bf16.msra.mxu0 0
    %1057 = vmatprep.subr.bf16.mxu0 0
    %1058 = vmatpush1.bf16.msra.mxu0 0
    %1059 = vmatprep.subr.bf16.mxu0 0
    %1060 = vmatpush1.bf16.msra.mxu0 %v1042
    %1061 = vmatprep.subr.bf16.mxu0 0
    %1062 = vmatpush1.bf16.msra.mxu0 %v1041
    %1063 = vmatprep.subr.bf16.mxu0 0
    %1064 = vmatpush1.bf16.msra.mxu0 %v1040
    %1065 = vmatprep.subr.bf16.mxu0 0
    %1066 = vmatpush1.bf16.msra.mxu0 %v1039
    %1067 = vmatprep.subr.bf16.mxu0 0
    %1068 = vmatpush2.bf16.msra.mxu0 0
    %1069 = vmatprep.subr.bf16.mxu0 0
    %1070 = vmatpush2.bf16.msra.mxu0 0
    %1071 = vmatprep.subr.bf16.mxu0 0
    %1072 = vmatpush2.bf16.msra.mxu0 0
    %1073 = vmatprep.subr.bf16.mxu0 0
    %1074 = vmatpush2.bf16.msra.mxu0 0
    %1075 = vmatprep.subr.bf16.mxu0 0
    %1076 = vmatpush2.bf16.msra.mxu0 0
    %1077 = vmatprep.subr.bf16.mxu0 0
    %1078 = vmatpush2.bf16.msra.mxu0 0
    %1079 = vmatprep.subr.bf16.mxu0 0
    %1080 = vmatpush2.bf16.msra.mxu0 0
    %1081 = vmatprep.subr.bf16.mxu0 0
    %1082 = vmatpush2.bf16.msra.mxu0 0
    %1083 = vmatprep.mubr.bf16.mxu0 0
    %1084 = vmatmul.mubr.bf16.gmra.mxu0 %v1049
    %v1085 = vpop.f32.mrf.mxu0
    %v1086 = vadd.f32 %v1022, %v1085
    %v1087 = vpop.f32.mrf.mxu0
    %v1088 = vpop.f32.mrf.mxu0
    %v1089 = vadd.f32 %v1022, %v1088
    %v1090 = vpop.f32.mrf.mxu0
    %1091 = vdwg.mxu0
    %v1092 = vadd.f32 %v939, %v1086
    %v1093 = vadd.f32 %v940, %v1089
    %v1094 = vld [vmem:[#allocation2 + $0x60] sm:$0x8]
    %v1095 = vunpack.c.l.bf16 %v1094
    %v1096 = vsel %vm114, %v1092, 0.0
    %1097 = vadd.xlane.f32.xlu0 %v1096
    %v1098 = vpop.xlane.xlu0 %1097
    %v1099 = vsel %vm114, %v1093, 0.0
    %1100 = vadd.xlane.f32.xlu0 %v1099
    %v1101 = vpop.xlane.xlu0 %1100
    %v1102 = vmul.f32 %v1098, %v908
    %v1103 = vmul.f32 %v1101, %v908
    %v1104 = vsub.f32 %v1092, %v1102
    %v1105 = vsub.f32 %v1093, %v1103
    %v1106 = vmul.f32 %v1104, %v1104
    %v1107 = vmul.f32 %v1105, %v1105
    %v1108 = vsel %vm114, %v1106, 0.0
    %1109 = vadd.xlane.f32.xlu0 %v1108
    %v1110 = vpop.xlane.xlu0 %1109
    %v1111 = vsel %vm114, %v1107, 0.0
    %1112 = vadd.xlane.f32.xlu0 %v1111
    %v1113 = vpop.xlane.xlu0 %1112
    %v1114 = vmul.f32 %v1110, %v908
    %v1115 = vmul.f32 %v1113, %v908
    %v1116 = vadd.f32 %v1114, 1e-05
    %v1117 = vadd.f32 %v1115, 1e-05
    %v1118 = vrsqrt.pop %v1116
    %v1119 = vrsqrt.pop %v1117
    %v1120 = vmul.f32 %v1104, %v1118
    %v1121 = vmul.f32 %v1105, %v1119
    %v1122 = vlaneseq
    %v1123 = vshrl.u32 %v1122, 7
    %v1124 = vsub.s32 6, %v1123
    %v1125 = vrot.slane %v1095, %v1124
    %v1126 = vmul.f32 %v1120, %v1125
    %v1127 = vmul.f32 %v1121, %v1125
    %v1128 = vlaneseq
    %v1129 = vshrl.u32 %v1128, 7
    %v1130 = vsub.s32 7, %v1129
    %v1131 = vrot.slane %v1095, %v1130
    %v1132 = vadd.f32 %v1126, %v1131
    %v1133 = vadd.f32 %v1127, %v1131
    %v1134 = vld [vmem:[#allocation2 + $0x64] sm:$0xf]
    %v1135 = vld [vmem:[#allocation2 + $0x68] sm:$0xf]
    %v1136 = vld [vmem:[#allocation2 + $0x6c] sm:$0xf]
    %v1137 = vld [vmem:[#allocation2 + $0x70] sm:$0xf]
    %v1138 = vpack.c.bf16 %v1133, %v1132
    %v1139 = vld [vmem:[#allocation2 + $0xb4] sm:$0x1]
    %v1140 = vunpack.c.l.bf16 %v1139
    %v1141 = vlaneseq
    %v1142 = vshrl.u32 %v1141, 7
    %v1143 = vsub.s32 0, %v1142
    %v1144 = vrot.slane %v1140, %v1143
    %v1149 = vunpack.c.l.b16 %v1134
    %v1150 = vunpack.c.l.b16 %v1135
    %v1151 = vunpack.c.l.b16 %v1136
    %v1152 = vunpack.c.l.b16 %v1137
    %v1153 = vpack.c.b16 %v1150, %v1149
    %v1154 = vpack.c.b16 %v1152, %v1151
    %v1158 = vsel %vm114, %v1138, 0
    %1160 = vmatprep.subr.bf16.mxu0 0
    %1161 = vmatpush1.bf16.msra.mxu0 0
    %1162 = vmatprep.subr.bf16.mxu0 0
    %1163 = vmatpush1.bf16.msra.mxu0 0
    %1164 = vmatprep.subr.bf16.mxu0 0
    %1165 = vmatpush1.bf16.msra.mxu0 0
    %1166 = vmatprep.subr.bf16.mxu0 0
    %1167 = vmatpush1.bf16.msra.mxu0 0
    %1168 = vmatprep.subr.bf16.mxu0 0
    %1169 = vmatpush1.bf16.msra.mxu0 0
    %1170 = vmatprep.subr.bf16.mxu0 0
    %1171 = vmatpush1.bf16.msra.mxu0 0
    %1172 = vmatprep.subr.bf16.mxu0 0
    %1173 = vmatpush1.bf16.msra.mxu0 %v1154
    %1174 = vmatprep.subr.bf16.mxu0 0
    %1175 = vmatpush1.bf16.msra.mxu0 %v1153
    %1176 = vmatprep.subr.bf16.mxu0 0
    %1177 = vmatpush2.bf16.msra.mxu0 0
    %1178 = vmatprep.subr.bf16.mxu0 0
    %1179 = vmatpush2.bf16.msra.mxu0 0
    %1180 = vmatprep.subr.bf16.mxu0 0
    %1181 = vmatpush2.bf16.msra.mxu0 0
    %1182 = vmatprep.subr.bf16.mxu0 0
    %1183 = vmatpush2.bf16.msra.mxu0 0
    %1184 = vmatprep.subr.bf16.mxu0 0
    %1185 = vmatpush2.bf16.msra.mxu0 0
    %1186 = vmatprep.subr.bf16.mxu0 0
    %1187 = vmatpush2.bf16.msra.mxu0 0
    %1188 = vmatprep.subr.bf16.mxu0 0
    %1189 = vmatpush2.bf16.msra.mxu0 0
    %1190 = vmatprep.subr.bf16.mxu0 0
    %1191 = vmatpush2.bf16.msra.mxu0 0
    %1192 = vmatprep.mubr.bf16.mxu0 0
    %1193 = vmatmul.mubr.bf16.gmra.mxu0 %v1158
    %v1194 = vpop.f32.mrf.mxu0
    %v1195 = vadd.f32 %v1144, %v1194
    %v1196 = vpop.f32.mrf.mxu0
    %v1197 = vpop.f32.mrf.mxu0
    %v1198 = vadd.f32 %v1144, %v1197
    %v1199 = vpop.f32.mrf.mxu0
    %1200 = vdwg.mxu0
    %v1201 = vpack.c.bf16 %v1198, %v1195
    %1204 = vrot.lane.b32.xlu0 %v1195, 96
    %v1205 = vpop.permute.xlu0 %1204
    %1206 = vrot.lane.b32.xlu0 %v1198, 96
    %v1207 = vpop.permute.xlu0 %1206
    %1210 = vxpose.xlu0.b32.start [1/16] %v1205, 128
    %1211 = vxpose.xlu0.b32.cont [2/16] %v1207, 128
    %1212 = vxpose.xlu0.b32.cont [3/16] 0.0, 128
    %1213 = vxpose.xlu0.b32.cont [4/16] 0.0, 128
    %1214 = vxpose.xlu0.b32.cont [5/16] 0.0, 128
    %1215 = vxpose.xlu0.b32.cont [6/16] 0.0, 128
    %1216 = vxpose.xlu0.b32.cont [7/16] 0.0, 128
    %1217 = vxpose.xlu0.b32.cont [8/16] 0.0, 128
    %1218 = vxpose.xlu0.b32.cont [9/16] 0.0, 128
    %1219 = vxpose.xlu0.b32.cont [10/16] 0.0, 128
    %1220 = vxpose.xlu0.b32.cont [11/16] 0.0, 128
    %1221 = vxpose.xlu0.b32.cont [12/16] 0.0, 128
    %1222 = vxpose.xlu0.b32.cont [13/16] 0.0, 128
    %1223 = vxpose.xlu0.b32.cont [14/16] 0.0, 128
    %1224 = vxpose.xlu0.b32.cont [15/16] 0.0, 128
    %1225 = vxpose.xlu0.b32.end [16/16] 0.0, 128
    %v1226 = vpop.trf.xlu0
    %v1227 = vpop.trf.xlu0
    %v1228 = vpop.trf.xlu0
    %v1229 = vpop.trf.xlu0
    %v1230 = vpop.trf.xlu0
    %v1231 = vpop.trf.xlu0
    %v1232 = vpop.trf.xlu0
    %v1233 = vpop.trf.xlu0
    %v1234 = vpop.trf.xlu0
    %v1235 = vpop.trf.xlu0
    %v1236 = vpop.trf.xlu0
    %v1237 = vpop.trf.xlu0
    %v1238 = vpop.trf.xlu0
    %v1239 = vpop.trf.xlu0
    %v1240 = vpop.trf.xlu0
    %v1241 = vpop.trf.xlu0
    %v1242 = vpack.c.bf16 %v1227, %v1226
    %v1243 = vpack.c.bf16 %v1229, %v1228
    %v1244 = vld [vmem:[#allocation2 + $0x74] sm:$0xf]
    %v1245 = vld [vmem:[#allocation2 + $0x78] sm:$0xf]
    %v1246 = vld [vmem:[#allocation2 + $0x7c] sm:$0xf]
    %v1247 = vld [vmem:[#allocation2 + $0x80] sm:$0xf]
    %v1249 = vsel %vm214, %v1201, 0
    %v1252 = vsel %vm218, %v1242, 0
    %1254 = vmatprep.subr.bf16.mxu0 0
    %1255 = vmatpush1.bf16.msra.mxu0 0
    %1256 = vmatprep.subr.bf16.mxu0 0
    %1257 = vmatpush1.bf16.msra.mxu0 0
    %1258 = vmatprep.subr.bf16.mxu0 0
    %1259 = vmatpush1.bf16.msra.mxu0 0
    %1260 = vmatprep.subr.bf16.mxu0 0
    %1261 = vmatpush1.bf16.msra.mxu0 0
    %1262 = vmatprep.subr.bf16.mxu0 0
    %1263 = vmatpush1.bf16.msra.mxu0 0
    %1264 = vmatprep.subr.bf16.mxu0 0
    %1265 = vmatpush1.bf16.msra.mxu0 0
    %1266 = vmatprep.subr.bf16.mxu0 0
    %1267 = vmatpush1.bf16.msra.mxu0 0
    %1268 = vmatprep.subr.bf16.mxu0 0
    %1269 = vmatpush1.bf16.msra.mxu0 %v1252
    %1270 = vmatprep.subr.bf16.mxu0 0
    %1271 = vmatpush2.bf16.msra.mxu0 0
    %1272 = vmatprep.subr.bf16.mxu0 0
    %1273 = vmatpush2.bf16.msra.mxu0 0
    %1274 = vmatprep.subr.bf16.mxu0 0
    %1275 = vmatpush2.bf16.msra.mxu0 0
    %1276 = vmatprep.subr.bf16.mxu0 0
    %1277 = vmatpush2.bf16.msra.mxu0 0
    %1278 = vmatprep.subr.bf16.mxu0 0
    %1279 = vmatpush2.bf16.msra.mxu0 0
    %1280 = vmatprep.subr.bf16.mxu0 0
    %1281 = vmatpush2.bf16.msra.mxu0 0
    %1282 = vmatprep.subr.bf16.mxu0 0
    %1283 = vmatpush2.bf16.msra.mxu0 0
    %1284 = vmatprep.subr.bf16.mxu0 0
    %1285 = vmatpush2.bf16.msra.mxu0 0
    %1286 = vmatprep.mubr.bf16.mxu0 0
    %1287 = vmatmul.mubr.bf16.gmra.mxu0 %v1249
    %v1288 = vpop.f32.mrf.mxu0
    %v1289 = vadd.f32 %v209, %v1288
    %v1290 = vpop.f32.mrf.mxu0
    %v1291 = vpop.f32.mrf.mxu0
    %v1292 = vadd.f32 %v211, %v1291
    %v1293 = vpop.f32.mrf.mxu0
    %1294 = vdwg.mxu0
    %v1295 = vsel %vm263, %v1289, -inf
    %1296 = vmax.xlane.f32.xlu0 %v1295
    %v1297 = vpop.xlane.xlu0 %1296
    %v1298 = vsel %vm263, %v1292, -inf
    %1299 = vmax.xlane.f32.xlu0 %v1298
    %v1300 = vpop.xlane.xlu0 %1299
    %v1301 = vsub.f32 %v1289, %v1297
    %v1302 = vsub.f32 %v1292, %v1300
    %v1303 = vmul.f32 %v1301, 1.442695
    %v1304 = vpow.pop %v1303
    %v1305 = vmul.f32 %v1302, 1.442695
    %v1306 = vpow.pop %v1305
    %v1307 = vsel %vm263, %v1304, 0.0
    %1308 = vadd.xlane.f32.xlu0 %v1307
    %v1309 = vpop.xlane.xlu0 %1308
    %v1310 = vsel %vm263, %v1306, 0.0
    %1311 = vadd.xlane.f32.xlu0 %v1310
    %v1312 = vpop.xlane.xlu0 %1311
    %v1313 = vrcp.pop %v1309
    %v1314 = vrcp.pop %v1312
    %v1315 = vmul.f32 %v1304, %v1313
    %v1316 = vmul.f32 %v1306, %v1314
    %v1317 = vpack.c.bf16 %v1316, %v1315
    %1319 = vrot.lane.b32.xlu0 %v1201, 64
    %v1320 = vpop.permute.xlu0 %1319
    %v1323 = vsel %vm263, %v1317, 0
    %1325 = vmatprep.subr.bf16.mxu0 0
    %1326 = vmatpush1.bf16.msra.mxu0 0
    %1327 = vmatprep.subr.bf16.mxu0 0
    %1328 = vmatpush1.bf16.msra.mxu0 0
    %1329 = vmatprep.subr.bf16.mxu0 0
    %1330 = vmatpush1.bf16.msra.mxu0 0
    %1331 = vmatprep.subr.bf16.mxu0 0
    %1332 = vmatpush1.bf16.msra.mxu0 0
    %1333 = vmatprep.subr.bf16.mxu0 0
    %1334 = vmatpush1.bf16.msra.mxu0 0
    %1335 = vmatprep.subr.bf16.mxu0 0
    %1336 = vmatpush1.bf16.msra.mxu0 0
    %1337 = vmatprep.subr.bf16.mxu0 0
    %1338 = vmatpush1.bf16.msra.mxu0 0
    %1339 = vmatprep.subr.bf16.mxu0 0
    %1340 = vmatpush1.bf16.msra.mxu0 %v1320
    %1341 = vmatprep.subr.bf16.mxu0 0
    %1342 = vmatpush2.bf16.msra.mxu0 0
    %1343 = vmatprep.subr.bf16.mxu0 0
    %1344 = vmatpush2.bf16.msra.mxu0 0
    %1345 = vmatprep.subr.bf16.mxu0 0
    %1346 = vmatpush2.bf16.msra.mxu0 0
    %1347 = vmatprep.subr.bf16.mxu0 0
    %1348 = vmatpush2.bf16.msra.mxu0 0
    %1349 = vmatprep.subr.bf16.mxu0 0
    %1350 = vmatpush2.bf16.msra.mxu0 0
    %1351 = vmatprep.subr.bf16.mxu0 0
    %1352 = vmatpush2.bf16.msra.mxu0 0
    %1353 = vmatprep.subr.bf16.mxu0 0
    %1354 = vmatpush2.bf16.msra.mxu0 0
    %1355 = vmatprep.subr.bf16.mxu0 0
    %1356 = vmatpush2.bf16.msra.mxu0 0
    %1357 = vmatprep.mubr.bf16.mxu0 0
    %1358 = vmatmul.mubr.bf16.gmra.mxu0 %v1323
    %v1359 = vpop.f32.mrf.mxu0
    %v1360 = vadd.f32 0.0, %v1359
    %v1361 = vpop.f32.mrf.mxu0
    %v1362 = vpop.f32.mrf.mxu0
    %v1363 = vadd.f32 0.0, %v1362
    %v1364 = vpop.f32.mrf.mxu0
    %1365 = vdwg.mxu0
    %v1366 = vpack.c.bf16 %v1363, %v1360
    %1367 = vrot.lane.b32.xlu0 %v1201, 120
    %v1368 = vpop.permute.xlu0 %1367
    %v1370 = vrot.slane %v1242, 4
    %v1372 = vsel %vm214, %v1368, 0
    %v1375 = vsel %vm218, %v1370, 0
    %1377 = vmatprep.subr.bf16.mxu0 0
    %1378 = vmatpush1.bf16.msra.mxu0 0
    %1379 = vmatprep.subr.bf16.mxu0 0
    %1380 = vmatpush1.bf16.msra.mxu0 0
    %1381 = vmatprep.subr.bf16.mxu0 0
    %1382 = vmatpush1.bf16.msra.mxu0 0
    %1383 = vmatprep.subr.bf16.mxu0 0
    %1384 = vmatpush1.bf16.msra.mxu0 0
    %1385 = vmatprep.subr.bf16.mxu0 0
    %1386 = vmatpush1.bf16.msra.mxu0 0
    %1387 = vmatprep.subr.bf16.mxu0 0
    %1388 = vmatpush1.bf16.msra.mxu0 0
    %1389 = vmatprep.subr.bf16.mxu0 0
    %1390 = vmatpush1.bf16.msra.mxu0 0
    %1391 = vmatprep.subr.bf16.mxu0 0
    %1392 = vmatpush1.bf16.msra.mxu0 %v1375
    %1393 = vmatprep.subr.bf16.mxu0 0
    %1394 = vmatpush2.bf16.msra.mxu0 0
    %1395 = vmatprep.subr.bf16.mxu0 0
    %1396 = vmatpush2.bf16.msra.mxu0 0
    %1397 = vmatprep.subr.bf16.mxu0 0
    %1398 = vmatpush2.bf16.msra.mxu0 0
    %1399 = vmatprep.subr.bf16.mxu0 0
    %1400 = vmatpush2.bf16.msra.mxu0 0
    %1401 = vmatprep.subr.bf16.mxu0 0
    %1402 = vmatpush2.bf16.msra.mxu0 0
    %1403 = vmatprep.subr.bf16.mxu0 0
    %1404 = vmatpush2.bf16.msra.mxu0 0
    %1405 = vmatprep.subr.bf16.mxu0 0
    %1406 = vmatpush2.bf16.msra.mxu0 0
    %1407 = vmatprep.subr.bf16.mxu0 0
    %1408 = vmatpush2.bf16.msra.mxu0 0
    %1409 = vmatprep.mubr.bf16.mxu0 0
    %1410 = vmatmul.mubr.bf16.gmra.mxu0 %v1372
    %v1411 = vpop.f32.mrf.mxu0
    %v1412 = vadd.f32 %v209, %v1411
    %v1413 = vpop.f32.mrf.mxu0
    %v1414 = vpop.f32.mrf.mxu0
    %v1415 = vadd.f32 %v211, %v1414
    %v1416 = vpop.f32.mrf.mxu0
    %1417 = vdwg.mxu0
    %v1418 = vsel %vm263, %v1412, -inf
    %1419 = vmax.xlane.f32.xlu0 %v1418
    %v1420 = vpop.xlane.xlu0 %1419
    %v1421 = vsel %vm263, %v1415, -inf
    %1422 = vmax.xlane.f32.xlu0 %v1421
    %v1423 = vpop.xlane.xlu0 %1422
    %v1424 = vsub.f32 %v1412, %v1420
    %v1425 = vsub.f32 %v1415, %v1423
    %v1426 = vmul.f32 %v1424, 1.442695
    %v1427 = vpow.pop %v1426
    %v1428 = vmul.f32 %v1425, 1.442695
    %v1429 = vpow.pop %v1428
    %v1430 = vsel %vm263, %v1427, 0.0
    %1431 = vadd.xlane.f32.xlu0 %v1430
    %v1432 = vpop.xlane.xlu0 %1431
    %v1433 = vsel %vm263, %v1429, 0.0
    %1434 = vadd.xlane.f32.xlu0 %v1433
    %v1435 = vpop.xlane.xlu0 %1434
    %v1436 = vrcp.pop %v1432
    %v1437 = vrcp.pop %v1435
    %v1438 = vmul.f32 %v1427, %v1436
    %v1439 = vmul.f32 %v1429, %v1437
    %v1440 = vpack.c.bf16 %v1439, %v1438
    %1441 = vrot.lane.b32.xlu0 %v1201, 56
    %v1442 = vpop.permute.xlu0 %1441
    %v1445 = vsel %vm263, %v1440, 0
    %1447 = vmatprep.subr.bf16.mxu0 0
    %1448 = vmatpush1.bf16.msra.mxu0 0
    %1449 = vmatprep.subr.bf16.mxu0 0
    %1450 = vmatpush1.bf16.msra.mxu0 0
    %1451 = vmatprep.subr.bf16.mxu0 0
    %1452 = vmatpush1.bf16.msra.mxu0 0
    %1453 = vmatprep.subr.bf16.mxu0 0
    %1454 = vmatpush1.bf16.msra.mxu0 0
    %1455 = vmatprep.subr.bf16.mxu0 0
    %1456 = vmatpush1.bf16.msra.mxu0 0
    %1457 = vmatprep.subr.bf16.mxu0 0
    %1458 = vmatpush1.bf16.msra.mxu0 0
    %1459 = vmatprep.subr.bf16.mxu0 0
    %1460 = vmatpush1.bf16.msra.mxu0 0
    %1461 = vmatprep.subr.bf16.mxu0 0
    %1462 = vmatpush1.bf16.msra.mxu0 %v1442
    %1463 = vmatprep.subr.bf16.mxu0 0
    %1464 = vmatpush2.bf16.msra.mxu0 0
    %1465 = vmatprep.subr.bf16.mxu0 0
    %1466 = vmatpush2.bf16.msra.mxu0 0
    %1467 = vmatprep.subr.bf16.mxu0 0
    %1468 = vmatpush2.bf16.msra.mxu0 0
    %1469 = vmatprep.subr.bf16.mxu0 0
    %1470 = vmatpush2.bf16.msra.mxu0 0
    %1471 = vmatprep.subr.bf16.mxu0 0
    %1472 = vmatpush2.bf16.msra.mxu0 0
    %1473 = vmatprep.subr.bf16.mxu0 0
    %1474 = vmatpush2.bf16.msra.mxu0 0
    %1475 = vmatprep.subr.bf16.mxu0 0
    %1476 = vmatpush2.bf16.msra.mxu0 0
    %1477 = vmatprep.subr.bf16.mxu0 0
    %1478 = vmatpush2.bf16.msra.mxu0 0
    %1479 = vmatprep.mubr.bf16.mxu0 0
    %1480 = vmatmul.mubr.bf16.gmra.mxu0 %v1445
    %v1481 = vpop.f32.mrf.mxu0
    %v1482 = vadd.f32 0.0, %v1481
    %v1483 = vpop.f32.mrf.mxu0
    %v1484 = vpop.f32.mrf.mxu0
    %v1485 = vadd.f32 0.0, %v1484
    %v1486 = vpop.f32.mrf.mxu0
    %1487 = vdwg.mxu0
    %v1488 = vpack.c.bf16 %v1485, %v1482
    %v1490 = vsel %vm214, %v1488, 0
    %v1493 = vsel %vm218, %v1245, 0
    %1495 = vmatprep.subr.bf16.mxu0 0
    %1496 = vmatpush1.bf16.msra.mxu0 0
    %1497 = vmatprep.subr.bf16.mxu0 0
    %1498 = vmatpush1.bf16.msra.mxu0 0
    %1499 = vmatprep.subr.bf16.mxu0 0
    %1500 = vmatpush1.bf16.msra.mxu0 0
    %1501 = vmatprep.subr.bf16.mxu0 0
    %1502 = vmatpush1.bf16.msra.mxu0 0
    %1503 = vmatprep.subr.bf16.mxu0 0
    %1504 = vmatpush1.bf16.msra.mxu0 0
    %1505 = vmatprep.subr.bf16.mxu0 0
    %1506 = vmatpush1.bf16.msra.mxu0 0
    %1507 = vmatprep.subr.bf16.mxu0 0
    %1508 = vmatpush1.bf16.msra.mxu0 0
    %1509 = vmatprep.subr.bf16.mxu0 0
    %1510 = vmatpush1.bf16.msra.mxu0 %v1493
    %1511 = vmatprep.subr.bf16.mxu0 0
    %1512 = vmatpush2.bf16.msra.mxu0 0
    %1513 = vmatprep.subr.bf16.mxu0 0
    %1514 = vmatpush2.bf16.msra.mxu0 0
    %1515 = vmatprep.subr.bf16.mxu0 0
    %1516 = vmatpush2.bf16.msra.mxu0 0
    %1517 = vmatprep.subr.bf16.mxu0 0
    %1518 = vmatpush2.bf16.msra.mxu0 0
    %1519 = vmatprep.subr.bf16.mxu0 0
    %1520 = vmatpush2.bf16.msra.mxu0 0
    %1521 = vmatprep.subr.bf16.mxu0 0
    %1522 = vmatpush2.bf16.msra.mxu0 0
    %1523 = vmatprep.subr.bf16.mxu0 0
    %1524 = vmatpush2.bf16.msra.mxu0 0
    %1525 = vmatprep.subr.bf16.mxu0 0
    %1526 = vmatpush2.bf16.msra.mxu0 0
    %1527 = vmatprep.mubr.bf16.mxu0 0
    %1528 = vmatmul.mubr.bf16.gmra.mxu0 %v1490
    %v1529 = vpop.f32.mrf.mxu0
    %v1530 = vadd.f32 0.0, %v1529
    %v1531 = vpop.f32.mrf.mxu0
    %v1532 = vpop.f32.mrf.mxu0
    %v1533 = vadd.f32 0.0, %v1532
    %v1534 = vpop.f32.mrf.mxu0
    %1535 = vdwg.mxu0
    %v1537 = vsel %vm214, %v1366, 0
    %v1540 = vsel %vm218, %v1244, 0
    %1542 = vmatprep.subr.bf16.mxu0 0
    %1543 = vmatpush1.bf16.msra.mxu0 0
    %1544 = vmatprep.subr.bf16.mxu0 0
    %1545 = vmatpush1.bf16.msra.mxu0 0
    %1546 = vmatprep.subr.bf16.mxu0 0
    %1547 = vmatpush1.bf16.msra.mxu0 0
    %1548 = vmatprep.subr.bf16.mxu0 0
    %1549 = vmatpush1.bf16.msra.mxu0 0
    %1550 = vmatprep.subr.bf16.mxu0 0
    %1551 = vmatpush1.bf16.msra.mxu0 0
    %1552 = vmatprep.subr.bf16.mxu0 0
    %1553 = vmatpush1.bf16.msra.mxu0 0
    %1554 = vmatprep.subr.bf16.mxu0 0
    %1555 = vmatpush1.bf16.msra.mxu0 0
    %1556 = vmatprep.subr.bf16.mxu0 0
    %1557 = vmatpush1.bf16.msra.mxu0 %v1540
    %1558 = vmatprep.subr.bf16.mxu0 0
    %1559 = vmatpush2.bf16.msra.mxu0 0
    %1560 = vmatprep.subr.bf16.mxu0 0
    %1561 = vmatpush2.bf16.msra.mxu0 0
    %1562 = vmatprep.subr.bf16.mxu0 0
    %1563 = vmatpush2.bf16.msra.mxu0 0
    %1564 = vmatprep.subr.bf16.mxu0 0
    %1565 = vmatpush2.bf16.msra.mxu0 0
    %1566 = vmatprep.subr.bf16.mxu0 0
    %1567 = vmatpush2.bf16.msra.mxu0 0
    %1568 = vmatprep.subr.bf16.mxu0 0
    %1569 = vmatpush2.bf16.msra.mxu0 0
    %1570 = vmatprep.subr.bf16.mxu0 0
    %1571 = vmatpush2.bf16.msra.mxu0 0
    %1572 = vmatprep.subr.bf16.mxu0 0
    %1573 = vmatpush2.bf16.msra.mxu0 0
    %1574 = vmatprep.mubr.bf16.mxu0 0
    %1575 = vmatmul.mubr.bf16.gmra.mxu0 %v1537
    %v1576 = vpop.f32.mrf.mxu0
    %v1577 = vadd.f32 %v1530, %v1576
    %v1578 = vpop.f32.mrf.mxu0
    %v1579 = vpop.f32.mrf.mxu0
    %v1580 = vadd.f32 %v1533, %v1579
    %v1581 = vpop.f32.mrf.mxu0
    %1582 = vdwg.mxu0
    %1583 = vrot.lane.b32.xlu0 %v1201, 112
    %v1584 = vpop.permute.xlu0 %1583
    %v1586 = vsel %vm214, %v1584, 0
    %v1589 = vsel %vm218, %v1243, 0
    %1591 = vmatprep.subr.bf16.mxu0 0
    %1592 = vmatpush1.bf16.msra.mxu0 0
    %1593 = vmatprep.subr.bf16.mxu0 0
    %1594 = vmatpush1.bf16.msra.mxu0 0
    %1595 = vmatprep.subr.bf16.mxu0 0
    %1596 = vmatpush1.bf16.msra.mxu0 0
    %1597 = vmatprep.subr.bf16.mxu0 0
    %1598 = vmatpush1.bf16.msra.mxu0 0
    %1599 = vmatprep.subr.bf16.mxu0 0
    %1600 = vmatpush1.bf16.msra.mxu0 0
    %1601 = vmatprep.subr.bf16.mxu0 0
    %1602 = vmatpush1.bf16.msra.mxu0 0
    %1603 = vmatprep.subr.bf16.mxu0 0
    %1604 = vmatpush1.bf16.msra.mxu0 0
    %1605 = vmatprep.subr.bf16.mxu0 0
    %1606 = vmatpush1.bf16.msra.mxu0 %v1589
    %1607 = vmatprep.subr.bf16.mxu0 0
    %1608 = vmatpush2.bf16.msra.mxu0 0
    %1609 = vmatprep.subr.bf16.mxu0 0
    %1610 = vmatpush2.bf16.msra.mxu0 0
    %1611 = vmatprep.subr.bf16.mxu0 0
    %1612 = vmatpush2.bf16.msra.mxu0 0
    %1613 = vmatprep.subr.bf16.mxu0 0
    %1614 = vmatpush2.bf16.msra.mxu0 0
    %1615 = vmatprep.subr.bf16.mxu0 0
    %1616 = vmatpush2.bf16.msra.mxu0 0
    %1617 = vmatprep.subr.bf16.mxu0 0
    %1618 = vmatpush2.bf16.msra.mxu0 0
    %1619 = vmatprep.subr.bf16.mxu0 0
    %1620 = vmatpush2.bf16.msra.mxu0 0
    %1621 = vmatprep.subr.bf16.mxu0 0
    %1622 = vmatpush2.bf16.msra.mxu0 0
    %1623 = vmatprep.mubr.bf16.mxu0 0
    %1624 = vmatmul.mubr.bf16.gmra.mxu0 %v1586
    %v1625 = vpop.f32.mrf.mxu0
    %v1626 = vadd.f32 %v209, %v1625
    %v1627 = vpop.f32.mrf.mxu0
    %v1628 = vpop.f32.mrf.mxu0
    %v1629 = vadd.f32 %v211, %v1628
    %v1630 = vpop.f32.mrf.mxu0
    %1631 = vdwg.mxu0
    %v1632 = vsel %vm263, %v1626, -inf
    %1633 = vmax.xlane.f32.xlu0 %v1632
    %v1634 = vpop.xlane.xlu0 %1633
    %v1635 = vsel %vm263, %v1629, -inf
    %1636 = vmax.xlane.f32.xlu0 %v1635
    %v1637 = vpop.xlane.xlu0 %1636
    %v1638 = vsub.f32 %v1626, %v1634
    %v1639 = vsub.f32 %v1629, %v1637
    %v1640 = vmul.f32 %v1638, 1.442695
    %v1641 = vpow.pop %v1640
    %v1642 = vmul.f32 %v1639, 1.442695
    %v1643 = vpow.pop %v1642
    %v1644 = vsel %vm263, %v1641, 0.0
    %1645 = vadd.xlane.f32.xlu0 %v1644
    %v1646 = vpop.xlane.xlu0 %1645
    %v1647 = vsel %vm263, %v1643, 0.0
    %1648 = vadd.xlane.f32.xlu0 %v1647
    %v1649 = vpop.xlane.xlu0 %1648
    %v1650 = vrcp.pop %v1646
    %v1651 = vrcp.pop %v1649
    %v1652 = vmul.f32 %v1641, %v1650
    %v1653 = vmul.f32 %v1643, %v1651
    %v1654 = vpack.c.bf16 %v1653, %v1652
    %1655 = vrot.lane.b32.xlu0 %v1201, 48
    %v1656 = vpop.permute.xlu0 %1655
    %v1659 = vsel %vm263, %v1654, 0
    %1661 = vmatprep.subr.bf16.mxu0 0
    %1662 = vmatpush1.bf16.msra.mxu0 0
    %1663 = vmatprep.subr.bf16.mxu0 0
    %1664 = vmatpush1.bf16.msra.mxu0 0
    %1665 = vmatprep.subr.bf16.mxu0 0
    %1666 = vmatpush1.bf16.msra.mxu0 0
    %1667 = vmatprep.subr.bf16.mxu0 0
    %1668 = vmatpush1.bf16.msra.mxu0 0
    %1669 = vmatprep.subr.bf16.mxu0 0
    %1670 = vmatpush1.bf16.msra.mxu0 0
    %1671 = vmatprep.subr.bf16.mxu0 0
    %1672 = vmatpush1.bf16.msra.mxu0 0
    %1673 = vmatprep.subr.bf16.mxu0 0
    %1674 = vmatpush1.bf16.msra.mxu0 0
    %1675 = vmatprep.subr.bf16.mxu0 0
    %1676 = vmatpush1.bf16.msra.mxu0 %v1656
    %1677 = vmatprep.subr.bf16.mxu0 0
    %1678 = vmatpush2.bf16.msra.mxu0 0
    %1679 = vmatprep.subr.bf16.mxu0 0
    %1680 = vmatpush2.bf16.msra.mxu0 0
    %1681 = vmatprep.subr.bf16.mxu0 0
    %1682 = vmatpush2.bf16.msra.mxu0 0
    %1683 = vmatprep.subr.bf16.mxu0 0
    %1684 = vmatpush2.bf16.msra.mxu0 0
    %1685 = vmatprep.subr.bf16.mxu0 0
    %1686 = vmatpush2.bf16.msra.mxu0 0
    %1687 = vmatprep.subr.bf16.mxu0 0
    %1688 = vmatpush2.bf16.msra.mxu0 0
    %1689 = vmatprep.subr.bf16.mxu0 0
    %1690 = vmatpush2.bf16.msra.mxu0 0
    %1691 = vmatprep.subr.bf16.mxu0 0
    %1692 = vmatpush2.bf16.msra.mxu0 0
    %1693 = vmatprep.mubr.bf16.mxu0 0
    %1694 = vmatmul.mubr.bf16.gmra.mxu0 %v1659
    %v1695 = vpop.f32.mrf.mxu0
    %v1696 = vadd.f32 0.0, %v1695
    %v1697 = vpop.f32.mrf.mxu0
    %v1698 = vpop.f32.mrf.mxu0
    %v1699 = vadd.f32 0.0, %v1698
    %v1700 = vpop.f32.mrf.mxu0
    %1701 = vdwg.mxu0
    %v1702 = vpack.c.bf16 %v1699, %v1696
    %v1704 = vsel %vm214, %v1702, 0
    %v1707 = vsel %vm218, %v1246, 0
    %1709 = vmatprep.subr.bf16.mxu0 0
    %1710 = vmatpush1.bf16.msra.mxu0 0
    %1711 = vmatprep.subr.bf16.mxu0 0
    %1712 = vmatpush1.bf16.msra.mxu0 0
    %1713 = vmatprep.subr.bf16.mxu0 0
    %1714 = vmatpush1.bf16.msra.mxu0 0
    %1715 = vmatprep.subr.bf16.mxu0 0
    %1716 = vmatpush1.bf16.msra.mxu0 0
    %1717 = vmatprep.subr.bf16.mxu0 0
    %1718 = vmatpush1.bf16.msra.mxu0 0
    %1719 = vmatprep.subr.bf16.mxu0 0
    %1720 = vmatpush1.bf16.msra.mxu0 0
    %1721 = vmatprep.subr.bf16.mxu0 0
    %1722 = vmatpush1.bf16.msra.mxu0 0
    %1723 = vmatprep.subr.bf16.mxu0 0
    %1724 = vmatpush1.bf16.msra.mxu0 %v1707
    %1725 = vmatprep.subr.bf16.mxu0 0
    %1726 = vmatpush2.bf16.msra.mxu0 0
    %1727 = vmatprep.subr.bf16.mxu0 0
    %1728 = vmatpush2.bf16.msra.mxu0 0
    %1729 = vmatprep.subr.bf16.mxu0 0
    %1730 = vmatpush2.bf16.msra.mxu0 0
    %1731 = vmatprep.subr.bf16.mxu0 0
    %1732 = vmatpush2.bf16.msra.mxu0 0
    %1733 = vmatprep.subr.bf16.mxu0 0
    %1734 = vmatpush2.bf16.msra.mxu0 0
    %1735 = vmatprep.subr.bf16.mxu0 0
    %1736 = vmatpush2.bf16.msra.mxu0 0
    %1737 = vmatprep.subr.bf16.mxu0 0
    %1738 = vmatpush2.bf16.msra.mxu0 0
    %1739 = vmatprep.subr.bf16.mxu0 0
    %1740 = vmatpush2.bf16.msra.mxu0 0
    %1741 = vmatprep.mubr.bf16.mxu0 0
    %1742 = vmatmul.mubr.bf16.gmra.mxu0 %v1704
    %v1743 = vpop.f32.mrf.mxu0
    %v1744 = vadd.f32 0.0, %v1743
    %v1745 = vpop.f32.mrf.mxu0
    %v1746 = vpop.f32.mrf.mxu0
    %v1747 = vadd.f32 0.0, %v1746
    %v1748 = vpop.f32.mrf.mxu0
    %1749 = vdwg.mxu0
    %v1750 = vadd.f32 %v1577, %v1744
    %v1751 = vadd.f32 %v1580, %v1747
    %1752 = vrot.lane.b32.xlu0 %v1201, 104
    %v1753 = vpop.permute.xlu0 %1752
    %v1755 = vrot.slane %v1243, 4
    %v1757 = vsel %vm214, %v1753, 0
    %v1760 = vsel %vm218, %v1755, 0
    %1762 = vmatprep.subr.bf16.mxu0 0
    %1763 = vmatpush1.bf16.msra.mxu0 0
    %1764 = vmatprep.subr.bf16.mxu0 0
    %1765 = vmatpush1.bf16.msra.mxu0 0
    %1766 = vmatprep.subr.bf16.mxu0 0
    %1767 = vmatpush1.bf16.msra.mxu0 0
    %1768 = vmatprep.subr.bf16.mxu0 0
    %1769 = vmatpush1.bf16.msra.mxu0 0
    %1770 = vmatprep.subr.bf16.mxu0 0
    %1771 = vmatpush1.bf16.msra.mxu0 0
    %1772 = vmatprep.subr.bf16.mxu0 0
    %1773 = vmatpush1.bf16.msra.mxu0 0
    %1774 = vmatprep.subr.bf16.mxu0 0
    %1775 = vmatpush1.bf16.msra.mxu0 0
    %1776 = vmatprep.subr.bf16.mxu0 0
    %1777 = vmatpush1.bf16.msra.mxu0 %v1760
    %1778 = vmatprep.subr.bf16.mxu0 0
    %1779 = vmatpush2.bf16.msra.mxu0 0
    %1780 = vmatprep.subr.bf16.mxu0 0
    %1781 = vmatpush2.bf16.msra.mxu0 0
    %1782 = vmatprep.subr.bf16.mxu0 0
    %1783 = vmatpush2.bf16.msra.mxu0 0
    %1784 = vmatprep.subr.bf16.mxu0 0
    %1785 = vmatpush2.bf16.msra.mxu0 0
    %1786 = vmatprep.subr.bf16.mxu0 0
    %1787 = vmatpush2.bf16.msra.mxu0 0
    %1788 = vmatprep.subr.bf16.mxu0 0
    %1789 = vmatpush2.bf16.msra.mxu0 0
    %1790 = vmatprep.subr.bf16.mxu0 0
    %1791 = vmatpush2.bf16.msra.mxu0 0
    %1792 = vmatprep.subr.bf16.mxu0 0
    %1793 = vmatpush2.bf16.msra.mxu0 0
    %1794 = vmatprep.mubr.bf16.mxu0 0
    %1795 = vmatmul.mubr.bf16.gmra.mxu0 %v1757
    %v1796 = vpop.f32.mrf.mxu0
    %v1797 = vadd.f32 %v209, %v1796
    %v1798 = vpop.f32.mrf.mxu0
    %v1799 = vpop.f32.mrf.mxu0
    %v1800 = vadd.f32 %v211, %v1799
    %v1801 = vpop.f32.mrf.mxu0
    %1802 = vdwg.mxu0
    %v1803 = vsel %vm263, %v1797, -inf
    %1804 = vmax.xlane.f32.xlu0 %v1803
    %v1805 = vpop.xlane.xlu0 %1804
    %v1806 = vsel %vm263, %v1800, -inf
    %1807 = vmax.xlane.f32.xlu0 %v1806
    %v1808 = vpop.xlane.xlu0 %1807
    %v1809 = vsub.f32 %v1797, %v1805
    %v1810 = vsub.f32 %v1800, %v1808
    %v1811 = vmul.f32 %v1809, 1.442695
    %v1812 = vpow.pop %v1811
    %v1813 = vmul.f32 %v1810, 1.442695
    %v1814 = vpow.pop %v1813
    %v1815 = vsel %vm263, %v1812, 0.0
    %1816 = vadd.xlane.f32.xlu0 %v1815
    %v1817 = vpop.xlane.xlu0 %1816
    %v1818 = vsel %vm263, %v1814, 0.0
    %1819 = vadd.xlane.f32.xlu0 %v1818
    %v1820 = vpop.xlane.xlu0 %1819
    %v1821 = vrcp.pop %v1817
    %v1822 = vrcp.pop %v1820
    %v1823 = vmul.f32 %v1812, %v1821
    %v1824 = vmul.f32 %v1814, %v1822
    %v1825 = vpack.c.bf16 %v1824, %v1823
    %1826 = vrot.lane.b32.xlu0 %v1201, 40
    %v1827 = vpop.permute.xlu0 %1826
    %v1830 = vsel %vm263, %v1825, 0
    %1832 = vmatprep.subr.bf16.mxu0 0
    %1833 = vmatpush1.bf16.msra.mxu0 0
    %1834 = vmatprep.subr.bf16.mxu0 0
    %1835 = vmatpush1.bf16.msra.mxu0 0
    %1836 = vmatprep.subr.bf16.mxu0 0
    %1837 = vmatpush1.bf16.msra.mxu0 0
    %1838 = vmatprep.subr.bf16.mxu0 0
    %1839 = vmatpush1.bf16.msra.mxu0 0
    %1840 = vmatprep.subr.bf16.mxu0 0
    %1841 = vmatpush1.bf16.msra.mxu0 0
    %1842 = vmatprep.subr.bf16.mxu0 0
    %1843 = vmatpush1.bf16.msra.mxu0 0
    %1844 = vmatprep.subr.bf16.mxu0 0
    %1845 = vmatpush1.bf16.msra.mxu0 0
    %1846 = vmatprep.subr.bf16.mxu0 0
    %1847 = vmatpush1.bf16.msra.mxu0 %v1827
    %1848 = vmatprep.subr.bf16.mxu0 0
    %1849 = vmatpush2.bf16.msra.mxu0 0
    %1850 = vmatprep.subr.bf16.mxu0 0
    %1851 = vmatpush2.bf16.msra.mxu0 0
    %1852 = vmatprep.subr.bf16.mxu0 0
    %1853 = vmatpush2.bf16.msra.mxu0 0
    %1854 = vmatprep.subr.bf16.mxu0 0
    %1855 = vmatpush2.bf16.msra.mxu0 0
    %1856 = vmatprep.subr.bf16.mxu0 0
    %1857 = vmatpush2.bf16.msra.mxu0 0
    %1858 = vmatprep.subr.bf16.mxu0 0
    %1859 = vmatpush2.bf16.msra.mxu0 0
    %1860 = vmatprep.subr.bf16.mxu0 0
    %1861 = vmatpush2.bf16.msra.mxu0 0
    %1862 = vmatprep.subr.bf16.mxu0 0
    %1863 = vmatpush2.bf16.msra.mxu0 0
    %1864 = vmatprep.mubr.bf16.mxu0 0
    %1865 = vmatmul.mubr.bf16.gmra.mxu0 %v1830
    %v1866 = vpop.f32.mrf.mxu0
    %v1867 = vadd.f32 0.0, %v1866
    %v1868 = vpop.f32.mrf.mxu0
    %v1869 = vpop.f32.mrf.mxu0
    %v1870 = vadd.f32 0.0, %v1869
    %v1871 = vpop.f32.mrf.mxu0
    %1872 = vdwg.mxu0
    %v1873 = vpack.c.bf16 %v1870, %v1867
    %v1875 = vsel %vm214, %v1873, 0
    %v1878 = vsel %vm218, %v1247, 0
    %1880 = vmatprep.subr.bf16.mxu0 0
    %1881 = vmatpush1.bf16.msra.mxu0 0
    %1882 = vmatprep.subr.bf16.mxu0 0
    %1883 = vmatpush1.bf16.msra.mxu0 0
    %1884 = vmatprep.subr.bf16.mxu0 0
    %1885 = vmatpush1.bf16.msra.mxu0 0
    %1886 = vmatprep.subr.bf16.mxu0 0
    %1887 = vmatpush1.bf16.msra.mxu0 0
    %1888 = vmatprep.subr.bf16.mxu0 0
    %1889 = vmatpush1.bf16.msra.mxu0 0
    %1890 = vmatprep.subr.bf16.mxu0 0
    %1891 = vmatpush1.bf16.msra.mxu0 0
    %1892 = vmatprep.subr.bf16.mxu0 0
    %1893 = vmatpush1.bf16.msra.mxu0 0
    %1894 = vmatprep.subr.bf16.mxu0 0
    %1895 = vmatpush1.bf16.msra.mxu0 %v1878
    %1896 = vmatprep.subr.bf16.mxu0 0
    %1897 = vmatpush2.bf16.msra.mxu0 0
    %1898 = vmatprep.subr.bf16.mxu0 0
    %1899 = vmatpush2.bf16.msra.mxu0 0
    %1900 = vmatprep.subr.bf16.mxu0 0
    %1901 = vmatpush2.bf16.msra.mxu0 0
    %1902 = vmatprep.subr.bf16.mxu0 0
    %1903 = vmatpush2.bf16.msra.mxu0 0
    %1904 = vmatprep.subr.bf16.mxu0 0
    %1905 = vmatpush2.bf16.msra.mxu0 0
    %1906 = vmatprep.subr.bf16.mxu0 0
    %1907 = vmatpush2.bf16.msra.mxu0 0
    %1908 = vmatprep.subr.bf16.mxu0 0
    %1909 = vmatpush2.bf16.msra.mxu0 0
    %1910 = vmatprep.subr.bf16.mxu0 0
    %1911 = vmatpush2.bf16.msra.mxu0 0
    %1912 = vmatprep.mubr.bf16.mxu0 0
    %1913 = vmatmul.mubr.bf16.gmra.mxu0 %v1875
    %v1914 = vpop.f32.mrf.mxu0
    %v1915 = vadd.f32 0.0, %v1914
    %v1916 = vpop.f32.mrf.mxu0
    %v1917 = vpop.f32.mrf.mxu0
    %v1918 = vadd.f32 0.0, %v1917
    %v1919 = vpop.f32.mrf.mxu0
    %1920 = vdwg.mxu0
    %v1921 = vadd.f32 %v1750, %v1915
    %v1922 = vadd.f32 %v1751, %v1918
    %v1923 = vlaneseq
    %v1924 = vshrl.u32 %v1923, 7
    %v1925 = vsub.s32 1, %v1924
    %v1926 = vrot.slane %v1140, %v1925
    %v1927 = vadd.f32 %v1921, %v1926
    %v1928 = vadd.f32 %v1922, %v1926
    %v1929 = vadd.f32 %v1132, %v1927
    %v1930 = vadd.f32 %v1133, %v1928
    %v1931 = vld [vmem:[#allocation2 + $0xb4] sm:$0x2]
    %v1932 = vunpack.c.l.bf16 %v1931
    %v1933 = vsel %vm114, %v1929, 0.0
    %1934 = vadd.xlane.f32.xlu0 %v1933
    %v1935 = vpop.xlane.xlu0 %1934
    %v1936 = vsel %vm114, %v1930, 0.0
    %1937 = vadd.xlane.f32.xlu0 %v1936
    %v1938 = vpop.xlane.xlu0 %1937
    %v1939 = vmul.f32 %v1935, %v908
    %v1940 = vmul.f32 %v1938, %v908
    %v1941 = vsub.f32 %v1929, %v1939
    %v1942 = vsub.f32 %v1930, %v1940
    %v1943 = vmul.f32 %v1941, %v1941
    %v1944 = vmul.f32 %v1942, %v1942
    %v1945 = vsel %vm114, %v1943, 0.0
    %1946 = vadd.xlane.f32.xlu0 %v1945
    %v1947 = vpop.xlane.xlu0 %1946
    %v1948 = vsel %vm114, %v1944, 0.0
    %1949 = vadd.xlane.f32.xlu0 %v1948
    %v1950 = vpop.xlane.xlu0 %1949
    %v1951 = vmul.f32 %v1947, %v908
    %v1952 = vmul.f32 %v1950, %v908
    %v1953 = vadd.f32 %v1951, 1e-05
    %v1954 = vadd.f32 %v1952, 1e-05
    %v1955 = vrsqrt.pop %v1953
    %v1956 = vrsqrt.pop %v1954
    %v1957 = vmul.f32 %v1941, %v1955
    %v1958 = vmul.f32 %v1942, %v1956
    %v1959 = vlaneseq
    %v1960 = vshrl.u32 %v1959, 7
    %v1961 = vsub.s32 2, %v1960
    %v1962 = vrot.slane %v1932, %v1961
    %v1963 = vmul.f32 %v1957, %v1962
    %v1964 = vmul.f32 %v1958, %v1962
    %v1965 = vlaneseq
    %v1966 = vshrl.u32 %v1965, 7
    %v1967 = vsub.s32 3, %v1966
    %v1968 = vrot.slane %v1932, %v1967
    %v1969 = vadd.f32 %v1963, %v1968
    %v1970 = vadd.f32 %v1964, %v1968
    %v1971 = vld [vmem:[#allocation2 + $0x84] sm:$0xf]
    %v1972 = vld [vmem:[#allocation2 + $0x88] sm:$0xf]
    %v1973 = vld [vmem:[#allocation2 + $0x8c] sm:$0xf]
    %v1974 = vld [vmem:[#allocation2 + $0x90] sm:$0xf]
    %v1975 = vpack.c.bf16 %v1970, %v1969
    %v1976 = vld [vmem:[#allocation2 + $0xb4] sm:$0x4]
    %v1977 = vunpack.c.l.bf16 %v1976
    %v1978 = vlaneseq
    %v1979 = vshrl.u32 %v1978, 7
    %v1980 = vsub.s32 4, %v1979
    %v1981 = vrot.slane %v1977, %v1980
    %v1986 = vunpack.c.l.b16 %v1971
    %v1987 = vunpack.c.l.b16 %v1972
    %v1988 = vunpack.c.l.b16 %v1973
    %v1989 = vunpack.c.l.b16 %v1974
    %v1990 = vpack.c.b16 %v1987, %v1986
    %v1991 = vpack.c.b16 %v1989, %v1988
    %v1995 = vsel %vm114, %v1975, 0
    %1997 = vmatprep.subr.bf16.mxu0 0
    %1998 = vmatpush1.bf16.msra.mxu0 0
    %1999 = vmatprep.subr.bf16.mxu0 0
    %2000 = vmatpush1.bf16.msra.mxu0 0
    %2001 = vmatprep.subr.bf16.mxu0 0
    %2002 = vmatpush1.bf16.msra.mxu0 0
    %2003 = vmatprep.subr.bf16.mxu0 0
    %2004 = vmatpush1.bf16.msra.mxu0 0
    %2005 = vmatprep.subr.bf16.mxu0 0
    %2006 = vmatpush1.bf16.msra.mxu0 0
    %2007 = vmatprep.subr.bf16.mxu0 0
    %2008 = vmatpush1.bf16.msra.mxu0 0
    %2009 = vmatprep.subr.bf16.mxu0 0
    %2010 = vmatpush1.bf16.msra.mxu0 %v1991
    %2011 = vmatprep.subr.bf16.mxu0 0
    %2012 = vmatpush1.bf16.msra.mxu0 %v1990
    %2013 = vmatprep.subr.bf16.mxu0 0
    %2014 = vmatpush2.bf16.msra.mxu0 0
    %2015 = vmatprep.subr.bf16.mxu0 0
    %2016 = vmatpush2.bf16.msra.mxu0 0
    %2017 = vmatprep.subr.bf16.mxu0 0
    %2018 = vmatpush2.bf16.msra.mxu0 0
    %2019 = vmatprep.subr.bf16.mxu0 0
    %2020 = vmatpush2.bf16.msra.mxu0 0
    %2021 = vmatprep.subr.bf16.mxu0 0
    %2022 = vmatpush2.bf16.msra.mxu0 0
    %2023 = vmatprep.subr.bf16.mxu0 0
    %2024 = vmatpush2.bf16.msra.mxu0 0
    %2025 = vmatprep.subr.bf16.mxu0 0
    %2026 = vmatpush2.bf16.msra.mxu0 0
    %2027 = vmatprep.subr.bf16.mxu0 0
    %2028 = vmatpush2.bf16.msra.mxu0 0
    %2029 = vmatprep.mubr.bf16.mxu0 0
    %2030 = vmatmul.mubr.bf16.gmra.mxu0 %v1995
    %v2031 = vpop.f32.mrf.mxu0
    %v2032 = vadd.f32 %v1981, %v2031
    %v2033 = vpop.f32.mrf.mxu0
    %v2034 = vpop.f32.mrf.mxu0
    %v2035 = vadd.f32 %v1981, %v2034
    %v2036 = vpop.f32.mrf.mxu0
    %2037 = vdwg.mxu0
    %v2038 = vmax.f32 %v2032, 0.0
    %v2039 = vmax.f32 %v2035, 0.0
    %v2040 = vld [vmem:[#allocation2 + $0x94] sm:$0xf]
    %v2041 = vld [vmem:[#allocation2 + $0x98] sm:$0xf]
    %v2042 = vld [vmem:[#allocation2 + $0x9c] sm:$0xf]
    %v2043 = vld [vmem:[#allocation2 + $0xa0] sm:$0xf]
    %v2044 = vld [vmem:[#allocation2 + $0xa4] sm:$0xf]
    %v2045 = vld [vmem:[#allocation2 + $0xa8] sm:$0xf]
    %v2046 = vld [vmem:[#allocation2 + $0xac] sm:$0xf]
    %v2047 = vld [vmem:[#allocation2 + $0xb0] sm:$0xf]
    %v2048 = vpack.c.bf16 %v2039, %v2038
    %v2049 = vlaneseq
    %v2050 = vshrl.u32 %v2049, 7
    %v2051 = vsub.s32 5, %v2050
    %v2052 = vrot.slane %v1977, %v2051
    %v2061 = vunpack.c.l.b16 %v2040
    %v2062 = vunpack.c.l.b16 %v2041
    %v2063 = vunpack.c.l.b16 %v2042
    %v2064 = vunpack.c.l.b16 %v2043
    %v2065 = vunpack.c.l.b16 %v2044
    %v2066 = vunpack.c.l.b16 %v2045
    %v2067 = vunpack.c.l.b16 %v2046
    %v2068 = vunpack.c.l.b16 %v2047
    %v2069 = vpack.c.b16 %v2062, %v2061
    %v2070 = vpack.c.b16 %v2064, %v2063
    %v2071 = vpack.c.b16 %v2066, %v2065
    %v2072 = vpack.c.b16 %v2068, %v2067
    %v2078 = vsel %vm1047, %v2048, 0
    %2080 = vmatprep.subr.bf16.mxu0 0
    %2081 = vmatpush1.bf16.msra.mxu0 0
    %2082 = vmatprep.subr.bf16.mxu0 0
    %2083 = vmatpush1.bf16.msra.mxu0 0
    %2084 = vmatprep.subr.bf16.mxu0 0
    %2085 = vmatpush1.bf16.msra.mxu0 0
    %2086 = vmatprep.subr.bf16.mxu0 0
    %2087 = vmatpush1.bf16.msra.mxu0 0
    %2088 = vmatprep.subr.bf16.mxu0 0
    %2089 = vmatpush1.bf16.msra.mxu0 %v2072
    %2090 = vmatprep.subr.bf16.mxu0 0
    %2091 = vmatpush1.bf16.msra.mxu0 %v2071
    %2092 = vmatprep.subr.bf16.mxu0 0
    %2093 = vmatpush1.bf16.msra.mxu0 %v2070
    %2094 = vmatprep.subr.bf16.mxu0 0
    %2095 = vmatpush1.bf16.msra.mxu0 %v2069
    %2096 = vmatprep.subr.bf16.mxu0 0
    %2097 = vmatpush2.bf16.msra.mxu0 0
    %2098 = vmatprep.subr.bf16.mxu0 0
    %2099 = vmatpush2.bf16.msra.mxu0 0
    %2100 = vmatprep.subr.bf16.mxu0 0
    %2101 = vmatpush2.bf16.msra.mxu0 0
    %2102 = vmatprep.subr.bf16.mxu0 0
    %2103 = vmatpush2.bf16.msra.mxu0 0
    %2104 = vmatprep.subr.bf16.mxu0 0
    %2105 = vmatpush2.bf16.msra.mxu0 0
    %2106 = vmatprep.subr.bf16.mxu0 0
    %2107 = vmatpush2.bf16.msra.mxu0 0
    %2108 = vmatprep.subr.bf16.mxu0 0
    %2109 = vmatpush2.bf16.msra.mxu0 0
    %2110 = vmatprep.subr.bf16.mxu0 0
    %2111 = vmatpush2.bf16.msra.mxu0 0
    %2112 = vmatprep.mubr.bf16.mxu0 0
    %2113 = vmatmul.mubr.bf16.gmra.mxu0 %v2078
    %v2114 = vpop.f32.mrf.mxu0
    %v2115 = vadd.f32 %v2052, %v2114
    %v2116 = vpop.f32.mrf.mxu0
    %v2117 = vpop.f32.mrf.mxu0
    %v2118 = vadd.f32 %v2052, %v2117
    %v2119 = vpop.f32.mrf.mxu0
    %2120 = vdwg.mxu0
    %v2121 = vadd.f32 %v1969, %v2115
    %v2122 = vadd.f32 %v1970, %v2118
    %v2123 = vld [vmem:[#allocation2 + $0xb4] sm:$0x8]
    %v2124 = vunpack.c.l.bf16 %v2123
    %v2125 = vsel %vm114, %v2121, 0.0
    %2126 = vadd.xlane.f32.xlu0 %v2125
    %v2127 = vpop.xlane.xlu0 %2126
    %v2128 = vsel %vm114, %v2122, 0.0
    %2129 = vadd.xlane.f32.xlu0 %v2128
    %v2130 = vpop.xlane.xlu0 %2129
    %v2131 = vmul.f32 %v2127, %v908
    %v2132 = vmul.f32 %v2130, %v908
    %v2133 = vsub.f32 %v2121, %v2131
    %v2134 = vsub.f32 %v2122, %v2132
    %v2135 = vmul.f32 %v2133, %v2133
    %v2136 = vmul.f32 %v2134, %v2134
    %v2137 = vsel %vm114, %v2135, 0.0
    %2138 = vadd.xlane.f32.xlu0 %v2137
    %v2139 = vpop.xlane.xlu0 %2138
    %v2140 = vsel %vm114, %v2136, 0.0
    %2141 = vadd.xlane.f32.xlu0 %v2140
    %v2142 = vpop.xlane.xlu0 %2141
    %v2143 = vmul.f32 %v2139, %v908
    %v2144 = vmul.f32 %v2142, %v908
    %v2145 = vadd.f32 %v2143, 1e-05
    %v2146 = vadd.f32 %v2144, 1e-05
    %v2147 = vrsqrt.pop %v2145
    %v2148 = vrsqrt.pop %v2146
    %v2149 = vmul.f32 %v2133, %v2147
    %v2150 = vmul.f32 %v2134, %v2148
    %v2151 = vlaneseq
    %v2152 = vshrl.u32 %v2151, 7
    %v2153 = vsub.s32 6, %v2152
    %v2154 = vrot.slane %v2124, %v2153
    %v2155 = vmul.f32 %v2149, %v2154
    %v2156 = vmul.f32 %v2150, %v2154
    %v2157 = vlaneseq
    %v2158 = vshrl.u32 %v2157, 7
    %v2159 = vsub.s32 7, %v2158
    %v2160 = vrot.slane %v2124, %v2159
    %v2161 = vadd.f32 %v2155, %v2160
    %v2162 = vadd.f32 %v2156, %v2160
    %v2164 = vrot.slane %v2161, 4
    %v2166 = vsel %vm218, %v2164, %v2162
    %v2167 = vld [vmem:[#allocation2 + $0xb8] sm:$0xf]
    %v2168 = vld [vmem:[#allocation2 + $0xbc] sm:$0xf]
    %v2169 = vld [vmem:[#allocation2 + $0xc0] sm:$0xf]
    %v2170 = vld [vmem:[#allocation2 + $0xc4] sm:$0xf]
    %v2171 = vpack.c.bf16 %v2166, %v2166
    %v2172 = vlaneseq
    %v2173 = vshrl.u32 %v2172, 7
    %v2174 = vsub.s32 1, %v2173
    %v2175 = vrot.slane %v31, %v2174
    %v2180 = vunpack.c.l.b16 %v2167
    %v2181 = vunpack.c.l.b16 %v2168
    %v2182 = vunpack.c.l.b16 %v2169
    %v2183 = vunpack.c.l.b16 %v2170
    %v2184 = vpack.c.b16 %v2181, %v2180
    %v2185 = vpack.c.b16 %v2183, %v2182
    %v2189 = vsel %vm114, %v2171, 0
    %2191 = vmatprep.subr.bf16.mxu0 0
    %2192 = vmatpush1.bf16.msra.mxu0 0
    %2193 = vmatprep.subr.bf16.mxu0 0
    %2194 = vmatpush1.bf16.msra.mxu0 0
    %2195 = vmatprep.subr.bf16.mxu0 0
    %2196 = vmatpush1.bf16.msra.mxu0 0
    %2197 = vmatprep.subr.bf16.mxu0 0
    %2198 = vmatpush1.bf16.msra.mxu0 0
    %2199 = vmatprep.subr.bf16.mxu0 0
    %2200 = vmatpush1.bf16.msra.mxu0 0
    %2201 = vmatprep.subr.bf16.mxu0 0
    %2202 = vmatpush1.bf16.msra.mxu0 0
    %2203 = vmatprep.subr.bf16.mxu0 0
    %2204 = vmatpush1.bf16.msra.mxu0 %v2185
    %2205 = vmatprep.subr.bf16.mxu0 0
    %2206 = vmatpush1.bf16.msra.mxu0 %v2184
    %2207 = vmatprep.subr.bf16.mxu0 0
    %2208 = vmatpush2.bf16.msra.mxu0 0
    %2209 = vmatprep.subr.bf16.mxu0 0
    %2210 = vmatpush2.bf16.msra.mxu0 0
    %2211 = vmatprep.subr.bf16.mxu0 0
    %2212 = vmatpush2.bf16.msra.mxu0 0
    %2213 = vmatprep.subr.bf16.mxu0 0
    %2214 = vmatpush2.bf16.msra.mxu0 0
    %2215 = vmatprep.subr.bf16.mxu0 0
    %2216 = vmatpush2.bf16.msra.mxu0 0
    %2217 = vmatprep.subr.bf16.mxu0 0
    %2218 = vmatpush2.bf16.msra.mxu0 0
    %2219 = vmatprep.subr.bf16.mxu0 0
    %2220 = vmatpush2.bf16.msra.mxu0 0
    %2221 = vmatprep.subr.bf16.mxu0 0
    %2222 = vmatpush2.bf16.msra.mxu0 0
    %2223 = vmatprep.mubr.bf16.mxu0 0
    %2224 = vmatmul.mubr.bf16.gmra.mxu0 %v2189
    %v2225 = vpop.f32.mrf.mxu0
    %v2226 = vadd.f32 %v2175, %v2225
    %v2227 = vpop.f32.mrf.mxu0
    %v2228 = vpop.f32.mrf.mxu0
    %v2229 = vpop.f32.mrf.mxu0
    %2230 = vdwg.mxu0
    %2231 = vst.msk [vmem:[%s2] sm:$0xff] %vm36, %v2226
    // Predicated region
    $region14: #{tpu_custom_call.1} parent=1 // pred_check
      _
    $region15: #{tpu_custom_call.1} parent=1 // pred_check_branch
      %2233 = sbr.rel (0) target = $region17
    $region16: #{tpu_custom_call.1} parent=1 // pred_region
      _
    $region17: #{tpu_custom_call.1} parent=1 // pred_fallthru
      _
    // Predicated region
    $region18: #{tpu_custom_call.1} parent=1 // pred_check
      _
    $region19: #{tpu_custom_call.1} parent=1 // pred_check_branch
      %2235 = sbr.rel (0) target = $region21
    $region20: #{tpu_custom_call.1} parent=1 // pred_region
      _
    $region21: #{tpu_custom_call.1} parent=1 // pred_fallthru
      _
    %2236 = vsyncpa [#allocation3], 1

</llo_original>
